<compile_context>
chip_gen: v7x
topology: tpu7x:2x2x1
jax: 0.10.0
libtpu: 0.0.40
codegen_flags: <defaults>
</compile_context>

<pallas_src>
import jax
import jax.numpy as jnp
from jax.experimental import pallas as pl
from jax.experimental.pallas import tpu as pltpu


TILE_M = 512  # M rows per grid step (multiple of 128); sweep 512-2048 in prod.


def _round_up(x, m):
    return (x + m - 1) // m * m


# ------------------------------ Pallas kernels ------------------------------

def _conv_stats_kernel(w_ref, p_ref, conv_ref, sum_ref, sq_ref):
    # w_ref   : (Cout, Kp)        bf16, resident across the grid
    # p_ref   : (Kp, TILE_M)      bf16 im2col tile (taps folded into Kp)
    # conv_ref: (Cout, TILE_M)    f32 conv output tile (lane-dense)
    # sum_ref : (1, Cout, 1)      per-tile channel sums      (for BN mean)
    # sq_ref  : (1, Cout, 1)      per-tile channel sum-of-sq (for BN var)
    acc = jnp.dot(w_ref[...], p_ref[...], preferred_element_type=jnp.float32)
    conv_ref[...] = acc
    sum_ref[...] = jnp.sum(acc, axis=1, keepdims=True)[None]
    sq_ref[...] = jnp.sum(acc * acc, axis=1, keepdims=True)[None]


def _conv_stats(w_bf16, patches_bf16, tile_m):
    Cout, Kp = w_bf16.shape
    _, Mp = patches_bf16.shape
    n_tiles = Mp // tile_m
    flops = 2 * Cout * Kp * Mp
    bytes_acc = (patches_bf16.size * 2 + n_tiles * w_bf16.size * 2
                 + Cout * Mp * 4 + 2 * n_tiles * Cout * 4)
    return pl.pallas_call(
        _conv_stats_kernel,
        out_shape=(
            jax.ShapeDtypeStruct((Cout, Mp), jnp.float32),
            jax.ShapeDtypeStruct((n_tiles, Cout, 1), jnp.float32),
            jax.ShapeDtypeStruct((n_tiles, Cout, 1), jnp.float32),
        ),
        grid=(n_tiles,),
        in_specs=[
            pl.BlockSpec((Cout, Kp), lambda i: (0, 0)),        # weights resident
            pl.BlockSpec((Kp, tile_m), lambda i: (0, i)),      # patches tile
        ],
        out_specs=(
            pl.BlockSpec((Cout, tile_m), lambda i: (0, i)),    # conv tile
            pl.BlockSpec((1, Cout, 1), lambda i: (i, 0, 0)),   # per-tile sum
            pl.BlockSpec((1, Cout, 1), lambda i: (i, 0, 0)),   # per-tile sumsq
        ),
        compiler_params=pltpu.CompilerParams(
            dimension_semantics=("parallel",),                 # v7x: 2 TCs split M
            vmem_limit_bytes=32 * 1024 * 1024),
        cost_estimate=pl.CostEstimate(
            flops=int(flops), transcendentals=0, bytes_accessed=int(bytes_acc)),
    )(w_bf16, patches_bf16)


def _bn_relu_kernel(scale_ref, shift_ref, x_ref, o_ref):
    # Folded BN + affine + ReLU: out = max(x * scale + shift, 0)
    o_ref[...] = jnp.maximum(x_ref[...] * scale_ref[...] + shift_ref[...], 0.0)


def _bn_relu(scale, shift, conv, tile_m):
    Cout, Mp = conv.shape
    n_tiles = Mp // tile_m
    return pl.pallas_call(
        _bn_relu_kernel,
        out_shape=jax.ShapeDtypeStruct((Cout, Mp), jnp.float32),
        grid=(n_tiles,),
        in_specs=[
            pl.BlockSpec((Cout, 1), lambda i: (0, 0)),         # scale resident
            pl.BlockSpec((Cout, 1), lambda i: (0, 0)),         # shift resident
            pl.BlockSpec((Cout, tile_m), lambda i: (0, i)),
        ],
        out_specs=pl.BlockSpec((Cout, tile_m), lambda i: (0, i)),
        compiler_params=pltpu.CompilerParams(
            dimension_semantics=("parallel",),
            vmem_limit_bytes=32 * 1024 * 1024),
        cost_estimate=pl.CostEstimate(
            flops=int(3 * Cout * Mp), transcendentals=0,
            bytes_accessed=int(2 * Cout * Mp * 4)),
    )(scale, shift, conv)


# ------------------------------ JAX glue ------------------------------

def _im2col_replicate_cf(x_cndhw):
    """(C, N, D, H, W) -> (27*C, N*D*H*W) taps of the replicate-padded volume.

    Kdim ordering is tap-major, channel-minor: row index = (kd*9+kh*3+kw)*C + c,
    matching the weight flattening below.
    """
    C, N, D, H, W = x_cndhw.shape
    xp = jnp.pad(x_cndhw, ((0, 0), (0, 0), (1, 1), (1, 1), (1, 1)), mode="edge")
    taps = []
    for kd in range(3):
        for kh in range(3):
            for kw in range(3):
                taps.append(
                    xp[:, :, kd:kd + D, kh:kh + H, kw:kw + W].reshape(C, -1))
    return jnp.concatenate(taps, axis=0)


def _layer(x_cf, w_torch, gamma, beta):
    """One Conv3d(3x3x3, replicate pad, bias=False) + BN3d(train stats) + ReLU.

    x_cf: (Cin, N, D, H, W) f32  ->  (Cout, N, D, H, W) f32
    """
    Cout, Cin = w_torch.shape[0], w_torch.shape[1]
    _, N, D, H, W = x_cf.shape
    M = N * D * H * W

    # im2col with taps folded into the contraction dim (single big-K matmul).
    patches = _im2col_replicate_cf(x_cf)                       # (27*Cin, M)
    K = patches.shape[0]
    Kp = _round_up(K, 32)                                      # sublane-friendly K
    Mp = _round_up(M, TILE_M)                                  # lane-tileable M
    patches = jnp.pad(patches, ((0, Kp - K), (0, Mp - M)))     # zero pad (safe)

    # PyTorch (Cout, Cin, kD, kH, kW) -> (Cout, kD, kH, kW, Cin) -> (Cout, K)
    w = jnp.transpose(w_torch, (0, 2, 3, 4, 1)).reshape(Cout, K)
    w = jnp.pad(w, ((0, 0), (0, Kp - K)))

    # Pass 1: conv (bf16 MXU, f32 accumulation) + per-tile BN partial stats.
    conv, psum, psq = _conv_stats(
        w.astype(jnp.bfloat16), patches.astype(jnp.bfloat16), TILE_M)

    # Reduce partial stats -> biased batch statistics (PyTorch training forward).
    total = jnp.sum(psum, axis=0)[:, 0]                        # (Cout,)
    total_sq = jnp.sum(psq, axis=0)[:, 0]                      # (Cout,)
    mean = total / M
    var = jnp.maximum(total_sq / M - mean * mean, 0.0)
    scale = gamma * jax.lax.rsqrt(var + 1e-5)
    shift = beta - mean * scale

    # Pass 2: fused scale/shift + ReLU per tile.
    y = _bn_relu(scale.reshape(Cout, 1), shift.reshape(Cout, 1), conv, TILE_M)
    return y[:, :M].reshape(Cout, N, D, H, W)


def init_convblock_params(in_feat, out_feat1, out_feat2, key):
    ks = jax.random.split(key, 6)

    def conv_w(k, cout, cin):
        # PyTorch Conv3d default init: U(-b, b), b = 1/sqrt(fan_in)
        bound = 1.0 / jnp.sqrt(cin * 27.0)
        return jax.random.uniform(k, (cout, cin, 3, 3, 3), jnp.float32,
                                  -bound, bound)

    return dict(
        w1=conv_w(ks[0], out_feat1, in_feat),
        w2=conv_w(ks[1], out_feat2, out_feat1),
        gamma1=jax.random.uniform(ks[2], (out_feat1,), jnp.float32, 0.5, 1.5),
        beta1=jax.random.uniform(ks[3], (out_feat1,), jnp.float32, -0.5, 0.5),
        gamma2=jax.random.uniform(ks[4], (out_feat2,), jnp.float32, 0.5, 1.5),
        beta2=jax.random.uniform(ks[5], (out_feat2,), jnp.float32, -0.5, 0.5),
    )


@jax.jit
def convblock_forward(params, x_ncdhw):
    # NCDHW -> channels-first-flattenable (C, N, D, H, W); the kernel's (Cout, M)
    # output reshapes straight back to this layout (no extra transpose).
    x = jnp.transpose(x_ncdhw, (1, 0, 2, 3, 4)).astype(jnp.float32)
    y = _layer(x, params["w1"], params["gamma1"], params["beta1"])
    y = _layer(y, params["w2"], params["gamma2"], params["beta2"])
    # TODO(synk): nn.Dropout(p=0.25) is stochastic in train mode and cannot match
    # PyTorch's RNG stream; implemented as identity (eval semantics).
    return jnp.transpose(y, (1, 0, 2, 3, 4))                   # back to NCDHW


# ------------------------------ demo ------------------------------

if __name__ == "__main__":
    key = jax.random.PRNGKey(0)
    k_param, k_x = jax.random.split(key)

    in_feat, out_feat1, out_feat2 = 4, 8, 8
    N, D, H, W = 2, 8, 8, 8

    params = init_convblock_params(in_feat, out_feat1, out_feat2, k_param)
    x = jax.random.normal(k_x, (N, in_feat, D, H, W), jnp.float32)  # NCDHW

    out = convblock_forward(params, x)
    out = jax.block_until_ready(out)
    assert out.shape == (N, out_feat2, D, H, W), out.shape
    print("KERNEL_OK")
</pallas_src>

<mosaic_0001>
module attributes {stable_mosaic.version = 11 : i64} {
  func.func @_conv_stats_kernel(%arg0: i32, %arg1: memref<8x128xbf16, #tpu.memory_space<vmem>>, %arg2: memref<128x512xbf16, #tpu.memory_space<vmem>>, %arg3: memref<8x512xf32, #tpu.memory_space<vmem>>, %arg4: memref<1x8x1xf32, #tpu.memory_space<vmem>>, %arg5: memref<1x8x1xf32, #tpu.memory_space<vmem>>) attributes {dimension_semantics = [#tpu.dimension_semantics<parallel>], iteration_bounds = array<i64: 2>, scalar_prefetch = 0 : i64, scratch_operands = 0 : i64, tpu.core_type = #tpu.core_type<tc>, window_params = [{pipeline_mode = #tpu.pipeline_mode<synchronous>, transform_indices = @transform_0, window_bounds = array<i64: 8, 128>}, {transform_indices = @transform_1, window_bounds = array<i64: 128, 512>}, {transform_indices = @transform_2, window_bounds = array<i64: 8, 512>}, {transform_indices = @transform_3, window_bounds = array<i64: 1, 8, 1>}, {transform_indices = @transform_4, window_bounds = array<i64: 1, 8, 1>}]} {
    %c0 = arith.constant 0 : index
    %c0_0 = arith.constant 0 : index
    %0 = vector.load %arg1[%c0, %c0_0] : memref<8x128xbf16, #tpu.memory_space<vmem>>, vector<8x128xbf16>
    %c0_1 = arith.constant 0 : index
    %c0_2 = arith.constant 0 : index
    %1 = vector.load %arg2[%c0_1, %c0_2] : memref<128x512xbf16, #tpu.memory_space<vmem>>, vector<128x512xbf16>
    %cst = arith.constant dense<0.000000e+00> : vector<8x512xf32>
    %2 = tpu.matmul %0, %1, %cst {dimension_numbers = #tpu.dot_dimension_numbers<[1], [0], [0], [1], [0, 0, 1, 1], [], []>} : vector<8x128xbf16>, vector<128x512xbf16>, vector<8x512xf32> -> vector<8x512xf32>
    %c0_3 = arith.constant 0 : index
    %c0_4 = arith.constant 0 : index
    %3 = vector.load %arg3[%c0_3, %c0_4] : memref<8x512xf32, #tpu.memory_space<vmem>>, vector<8x512xf32>
    tpu.vector_store %arg3[%c0_3, %c0_4], %2 {strides = array<i32>} : memref<8x512xf32, #tpu.memory_space<vmem>>, vector<8x512xf32>,
    %cst_5 = arith.constant dense<0.000000e+00> : vector<8xf32>
    %4 = vector.multi_reduction <add>, %2, %cst_5 [1] : vector<8x512xf32> to vector<8xf32>
    %5 = vector.shape_cast %4 : vector<8xf32> to vector<8x1xf32>
    %6 = vector.shape_cast %5 : vector<8x1xf32> to vector<1x8x1xf32>
    %c0_6 = arith.constant 0 : index
    %c0_7 = arith.constant 0 : index
    %c0_8 = arith.constant 0 : index
    %7 = vector.load %arg4[%c0_6, %c0_7, %c0_8] : memref<1x8x1xf32, #tpu.memory_space<vmem>>, vector<1x8x1xf32>
    tpu.vector_store %arg4[%c0_6, %c0_7, %c0_8], %6 {strides = array<i32>} : memref<1x8x1xf32, #tpu.memory_space<vmem>>, vector<1x8x1xf32>,
    %8 = arith.mulf %2, %2 : vector<8x512xf32>
    %cst_9 = arith.constant dense<0.000000e+00> : vector<8xf32>
    %9 = vector.multi_reduction <add>, %8, %cst_9 [1] : vector<8x512xf32> to vector<8xf32>
    %10 = vector.shape_cast %9 : vector<8xf32> to vector<8x1xf32>
    %11 = vector.shape_cast %10 : vector<8x1xf32> to vector<1x8x1xf32>
    %c0_10 = arith.constant 0 : index
    %c0_11 = arith.constant 0 : index
    %c0_12 = arith.constant 0 : index
    %12 = vector.load %arg5[%c0_10, %c0_11, %c0_12] : memref<1x8x1xf32, #tpu.memory_space<vmem>>, vector<1x8x1xf32>
    tpu.vector_store %arg5[%c0_10, %c0_11, %c0_12], %11 {strides = array<i32>} : memref<1x8x1xf32, #tpu.memory_space<vmem>>, vector<1x8x1xf32>,
    return
  }
  func.func @transform_0(%arg0: i32) -> (i32, i32) {
    %c0_i32 = arith.constant 0 : i32
    %c0_i32_0 = arith.constant 0 : i32
    %c0_i32_1 = arith.constant 0 : i32
    return %c0_i32, %c0_i32_0 : i32, i32
  }
  func.func @transform_1(%arg0: i32) -> (i32, i32) {
    %c0_i32 = arith.constant 0 : i32
    %c0_i32_0 = arith.constant 0 : i32
    return %c0_i32, %arg0 : i32, i32
  }
  func.func @transform_2(%arg0: i32) -> (i32, i32) {
    %c0_i32 = arith.constant 0 : i32
    %c0_i32_0 = arith.constant 0 : i32
    return %c0_i32, %arg0 : i32, i32
  }
  func.func @transform_3(%arg0: i32) -> (i32, i32, i32) {
    %c0_i32 = arith.constant 0 : i32
    %c0_i32_0 = arith.constant 0 : i32
    %c0_i32_1 = arith.constant 0 : i32
    return %arg0, %c0_i32, %c0_i32_0 : i32, i32, i32
  }
  func.func @transform_4(%arg0: i32) -> (i32, i32, i32) {
    %c0_i32 = arith.constant 0 : i32
    %c0_i32_0 = arith.constant 0 : i32
    %c0_i32_1 = arith.constant 0 : i32
    return %arg0, %c0_i32, %c0_i32_0 : i32, i32, i32
  }
}

module attributes {stable_mosaic.version = 11 : i64} {
  func.func @_bn_relu_kernel(%arg0: i32, %arg1: memref<8x1xf32, #tpu.memory_space<vmem>>, %arg2: memref<8x1xf32, #tpu.memory_space<vmem>>, %arg3: memref<8x512xf32, #tpu.memory_space<vmem>>, %arg4: memref<8x512xf32, #tpu.memory_space<vmem>>) attributes {dimension_semantics = [#tpu.dimension_semantics<parallel>], iteration_bounds = array<i64: 2>, scalar_prefetch = 0 : i64, scratch_operands = 0 : i64, tpu.core_type = #tpu.core_type<tc>, window_params = [{pipeline_mode = #tpu.pipeline_mode<synchronous>, transform_indices = @transform_0, window_bounds = array<i64: 8, 1>}, {pipeline_mode = #tpu.pipeline_mode<synchronous>, transform_indices = @transform_1, window_bounds = array<i64: 8, 1>}, {transform_indices = @transform_2, window_bounds = array<i64: 8, 512>}, {transform_indices = @transform_3, window_bounds = array<i64: 8, 512>}]} {
    %c0 = arith.constant 0 : index
    %c0_0 = arith.constant 0 : index
    %0 = vector.load %arg3[%c0, %c0_0] : memref<8x512xf32, #tpu.memory_space<vmem>>, vector<8x512xf32>
    %c0_1 = arith.constant 0 : index
    %c0_2 = arith.constant 0 : index
    %1 = vector.load %arg1[%c0_1, %c0_2] : memref<8x1xf32, #tpu.memory_space<vmem>>, vector<8x1xf32>
    %2 = vector.broadcast %1 : vector<8x1xf32> to vector<8x512xf32>
    %3 = arith.mulf %0, %2 : vector<8x512xf32>
    %c0_3 = arith.constant 0 : index
    %c0_4 = arith.constant 0 : index
    %4 = vector.load %arg2[%c0_3, %c0_4] : memref<8x1xf32, #tpu.memory_space<vmem>>, vector<8x1xf32>
    %5 = vector.broadcast %4 : vector<8x1xf32> to vector<8x512xf32>
    %6 = arith.addf %3, %5 : vector<8x512xf32>
    %cst = arith.constant 0.000000e+00 : f32
    %7 = vector.broadcast %cst : f32 to vector<8x512xf32>
    %8 = arith.maximumf %6, %7 : vector<8x512xf32>
    %c0_5 = arith.constant 0 : index
    %c0_6 = arith.constant 0 : index
    %9 = vector.load %arg4[%c0_5, %c0_6] : memref<8x512xf32, #tpu.memory_space<vmem>>, vector<8x512xf32>
    tpu.vector_store %arg4[%c0_5, %c0_6], %8 {strides = array<i32>} : memref<8x512xf32, #tpu.memory_space<vmem>>, vector<8x512xf32>,
    return
  }
  func.func @transform_0(%arg0: i32) -> (i32, i32) {
    %c0_i32 = arith.constant 0 : i32
    %c0_i32_0 = arith.constant 0 : i32
    %c0_i32_1 = arith.constant 0 : i32
    return %c0_i32, %c0_i32_0 : i32, i32
  }
  func.func @transform_1(%arg0: i32) -> (i32, i32) {
    %c0_i32 = arith.constant 0 : i32
    %c0_i32_0 = arith.constant 0 : i32
    %c0_i32_1 = arith.constant 0 : i32
    return %c0_i32, %c0_i32_0 : i32, i32
  }
  func.func @transform_2(%arg0: i32) -> (i32, i32) {
    %c0_i32 = arith.constant 0 : i32
    %c0_i32_0 = arith.constant 0 : i32
    return %c0_i32, %arg0 : i32, i32
  }
  func.func @transform_3(%arg0: i32) -> (i32, i32) {
    %c0_i32 = arith.constant 0 : i32
    %c0_i32_0 = arith.constant 0 : i32
    return %c0_i32, %arg0 : i32, i32
  }
}

module attributes {stable_mosaic.version = 11 : i64} {
  func.func @_conv_stats_kernel(%arg0: i32, %arg1: memref<8x224xbf16, #tpu.memory_space<vmem>>, %arg2: memref<224x512xbf16, #tpu.memory_space<vmem>>, %arg3: memref<8x512xf32, #tpu.memory_space<vmem>>, %arg4: memref<1x8x1xf32, #tpu.memory_space<vmem>>, %arg5: memref<1x8x1xf32, #tpu.memory_space<vmem>>) attributes {dimension_semantics = [#tpu.dimension_semantics<parallel>], iteration_bounds = array<i64: 2>, scalar_prefetch = 0 : i64, scratch_operands = 0 : i64, tpu.core_type = #tpu.core_type<tc>, window_params = [{pipeline_mode = #tpu.pipeline_mode<synchronous>, transform_indices = @transform_0, window_bounds = array<i64: 8, 224>}, {transform_indices = @transform_1, window_bounds = array<i64: 224, 512>}, {transform_indices = @transform_2, window_bounds = array<i64: 8, 512>}, {transform_indices = @transform_3, window_bounds = array<i64: 1, 8, 1>}, {transform_indices = @transform_4, window_bounds = array<i64: 1, 8, 1>}]} {
    %c0 = arith.constant 0 : index
    %c0_0 = arith.constant 0 : index
    %0 = vector.load %arg1[%c0, %c0_0] : memref<8x224xbf16, #tpu.memory_space<vmem>>, vector<8x224xbf16>
    %c0_1 = arith.constant 0 : index
    %c0_2 = arith.constant 0 : index
    %1 = vector.load %arg2[%c0_1, %c0_2] : memref<224x512xbf16, #tpu.memory_space<vmem>>, vector<224x512xbf16>
    %cst = arith.constant dense<0.000000e+00> : vector<8x512xf32>
    %2 = tpu.matmul %0, %1, %cst {dimension_numbers = #tpu.dot_dimension_numbers<[1], [0], [0], [1], [0, 0, 1, 1], [], []>} : vector<8x224xbf16>, vector<224x512xbf16>, vector<8x512xf32> -> vector<8x512xf32>
    %c0_3 = arith.constant 0 : index
    %c0_4 = arith.constant 0 : index
    %3 = vector.load %arg3[%c0_3, %c0_4] : memref<8x512xf32, #tpu.memory_space<vmem>>, vector<8x512xf32>
    tpu.vector_store %arg3[%c0_3, %c0_4], %2 {strides = array<i32>} : memref<8x512xf32, #tpu.memory_space<vmem>>, vector<8x512xf32>,
    %cst_5 = arith.constant dense<0.000000e+00> : vector<8xf32>
    %4 = vector.multi_reduction <add>, %2, %cst_5 [1] : vector<8x512xf32> to vector<8xf32>
    %5 = vector.shape_cast %4 : vector<8xf32> to vector<8x1xf32>
    %6 = vector.shape_cast %5 : vector<8x1xf32> to vector<1x8x1xf32>
    %c0_6 = arith.constant 0 : index
    %c0_7 = arith.constant 0 : index
    %c0_8 = arith.constant 0 : index
    %7 = vector.load %arg4[%c0_6, %c0_7, %c0_8] : memref<1x8x1xf32, #tpu.memory_space<vmem>>, vector<1x8x1xf32>
    tpu.vector_store %arg4[%c0_6, %c0_7, %c0_8], %6 {strides = array<i32>} : memref<1x8x1xf32, #tpu.memory_space<vmem>>, vector<1x8x1xf32>,
    %8 = arith.mulf %2, %2 : vector<8x512xf32>
    %cst_9 = arith.constant dense<0.000000e+00> : vector<8xf32>
    %9 = vector.multi_reduction <add>, %8, %cst_9 [1] : vector<8x512xf32> to vector<8xf32>
    %10 = vector.shape_cast %9 : vector<8xf32> to vector<8x1xf32>
    %11 = vector.shape_cast %10 : vector<8x1xf32> to vector<1x8x1xf32>
    %c0_10 = arith.constant 0 : index
    %c0_11 = arith.constant 0 : index
    %c0_12 = arith.constant 0 : index
    %12 = vector.load %arg5[%c0_10, %c0_11, %c0_12] : memref<1x8x1xf32, #tpu.memory_space<vmem>>, vector<1x8x1xf32>
    tpu.vector_store %arg5[%c0_10, %c0_11, %c0_12], %11 {strides = array<i32>} : memref<1x8x1xf32, #tpu.memory_space<vmem>>, vector<1x8x1xf32>,
    return
  }
  func.func @transform_0(%arg0: i32) -> (i32, i32) {
    %c0_i32 = arith.constant 0 : i32
    %c0_i32_0 = arith.constant 0 : i32
    %c0_i32_1 = arith.constant 0 : i32
    return %c0_i32, %c0_i32_0 : i32, i32
  }
  func.func @transform_1(%arg0: i32) -> (i32, i32) {
    %c0_i32 = arith.constant 0 : i32
    %c0_i32_0 = arith.constant 0 : i32
    return %c0_i32, %arg0 : i32, i32
  }
  func.func @transform_2(%arg0: i32) -> (i32, i32) {
    %c0_i32 = arith.constant 0 : i32
    %c0_i32_0 = arith.constant 0 : i32
    return %c0_i32, %arg0 : i32, i32
  }
  func.func @transform_3(%arg0: i32) -> (i32, i32, i32) {
    %c0_i32 = arith.constant 0 : i32
    %c0_i32_0 = arith.constant 0 : i32
    %c0_i32_1 = arith.constant 0 : i32
    return %arg0, %c0_i32, %c0_i32_0 : i32, i32, i32
  }
  func.func @transform_4(%arg0: i32) -> (i32, i32, i32) {
    %c0_i32 = arith.constant 0 : i32
    %c0_i32_0 = arith.constant 0 : i32
    %c0_i32_1 = arith.constant 0 : i32
    return %arg0, %c0_i32, %c0_i32_0 : i32, i32, i32
  }
}

</mosaic_0001>

<llo_original>
// kernel: convblock_forward.4
$region0: #{convblock_forward.4}
  #allocation0 [shape = 'u32[]', space=smem, size = 0x4, offset = 0x4, fixed_abs, tag = 'smem constant byte address 0x4 - core index']
  #allocation1 [shape = 'u32[144,128]{1,0:T(1,128)}', space=vmem, size = 0x12000, scoped, tag = 'internal scratch']
  %s0 = inlined_call_operand.vmem [shape: bf16[8,128], index: 0, kind: input, shape index: {}]
  %s1 = inlined_call_operand.vmem [shape: bf16[128,1024], index: 1, kind: input, shape index: {}]
  %s2 = inlined_call_operand.vmem [shape: f32[8,1024], index: 2, kind: output, shape index: {0}]
  %s3 = inlined_call_operand.vmem [shape: f32[2,8,1], index: 3, kind: output, shape index: {1}]
  %s4 = inlined_call_operand.vmem [shape: f32[2,8,1], index: 4, kind: output, shape index: {2}]
  %5 = xla_tuple %s2, %s3, %s4
  %s6 = sld [smem:[#allocation0]]
  $region80: #{convblock_forward.4} parent=0
    _
  %s8 = ssub.s32 1, %s6
  %s9 = scalar_select 0, %s8, %s6
  $region1: #{convblock_forward.4} parent=0
    #allocation2 [shape = 'u8[262144]{0}', space=vmem, size = 0x40000, scoped, tag = 'input window, operand 1']
    loop: start=0, step=1, limit=4
    $region2: #{convblock_forward.4} parent=1 // loop_pre_header
      _
    $region3: #{convblock_forward.4} parent=1 // loop_header
      %s11 = sphi 0, %s15
      %p12 = scmp.ge.s32.totalorder %s11, 4
      %s19 = sphi 0, %s19
      %s21 = sphi 0, %s19
      %s22 = sphi 0, %s21
      %s36 = sphi 0, %s22
      %s42 = sphi 0, %s44
      %s45 = sphi 0, %s42
      %s46 = sphi 0, %s45
      %s62 = sphi 0, %s46
      %s68 = sphi 0, %s70
      %s71 = sphi 0, %s68
      %s72 = sphi 0, %s71
      %s88 = sphi 0, %s72
      %s94 = sphi 0, %s96
      %s97 = sphi 0, %s94
      %s98 = sphi 0, %s97
      %s114 = sphi 0, %s98
      %s120 = sphi 0, %s122
      %s123 = sphi 0, %s120
      %s124 = sphi 0, %s123
      %s140 = sphi 0, %s124
    $region4: #{convblock_forward.4} parent=1 // loop_header_branch
      %14 = sbr.rel (%p12) target = $region8
    $region5: #{convblock_forward.4} parent=1 // loop_body
      %s16 = ssub.s32 %s11, 1
      %s17 = ssub.s32 %s11, 2
      %s18 = sadd.s32 %s11, 1
      %s20 = sadd.s32 %s19, 1
      %p23 = scmp.eq.s32.totalorder %s11, 1
      %p24 = scmp.ne.s32.totalorder %s19, %s21
      %p25 = scmp.eq.s32.totalorder %s11, 0
      %p26 = por %p24, %p25
      %p27 = scmp.ne.s32.totalorder %s19, %s21
      %p28 = scmp.eq.s32.totalorder %s16, 1
      %p29 = por %p27, %p28
      %p30 = scmp.ne.s32.totalorder %s21, %s22
      %p31 = scmp.eq.s32.totalorder %s16, 0
      %p32 = por %p30, %p31
      %p33 = scmp.ne.s32.totalorder %s21, %s22
      %p34 = scmp.eq.s32.totalorder %s17, 1
      %p35 = por %p33, %p34
      %p37 = scmp.ne.s32.totalorder %s22, %s36
      %p38 = scmp.eq.s32.totalorder %s17, 0
      %p39 = por %p37, %p38
      %s40 = ssub.s32 %s11, %s18
      %p41 = scmp.eq.s32.totalorder %s40, 0
      %s43 = sadd.s32 %s42, 1
      %s44 = scalar_select %p41, %s42, %s43
      %p47 = pneg %p41
      %p48 = scmp.eq.s32.totalorder %s11, 1
      %p49 = por %p47, %p48
      %p50 = scmp.ne.s32.totalorder %s42, %s45
      %p51 = scmp.eq.s32.totalorder %s11, 0
      %p52 = por %p50, %p51
      %p53 = scmp.ne.s32.totalorder %s42, %s45
      %p54 = scmp.eq.s32.totalorder %s16, 1
      %p55 = por %p53, %p54
      %p56 = scmp.ne.s32.totalorder %s45, %s46
      %p57 = scmp.eq.s32.totalorder %s16, 0
      %p58 = por %p56, %p57
      %p59 = scmp.ne.s32.totalorder %s45, %s46
      %p60 = scmp.eq.s32.totalorder %s17, 1
      %p61 = por %p59, %p60
      %p63 = scmp.ne.s32.totalorder %s46, %s62
      %p64 = scmp.eq.s32.totalorder %s17, 0
      %p65 = por %p63, %p64
      %s66 = ssub.s32 %s11, %s18
      %p67 = scmp.eq.s32.totalorder %s66, 0
      %s69 = sadd.s32 %s68, 1
      %s70 = scalar_select %p67, %s68, %s69
      %p73 = pneg %p67
      %p74 = scmp.eq.s32.totalorder %s11, 1
      %p75 = por %p73, %p74
      %p76 = scmp.ne.s32.totalorder %s68, %s71
      %p77 = scmp.eq.s32.totalorder %s11, 0
      %p78 = por %p76, %p77
      %p79 = scmp.ne.s32.totalorder %s68, %s71
      %p80 = scmp.eq.s32.totalorder %s16, 1
      %p81 = por %p79, %p80
      %p82 = scmp.ne.s32.totalorder %s71, %s72
      %p83 = scmp.eq.s32.totalorder %s16, 0
      %p84 = por %p82, %p83
      %p85 = scmp.ne.s32.totalorder %s71, %s72
      %p86 = scmp.eq.s32.totalorder %s17, 1
      %p87 = por %p85, %p86
      %p89 = scmp.ne.s32.totalorder %s72, %s88
      %p90 = scmp.eq.s32.totalorder %s17, 0
      %p91 = por %p89, %p90
      %s92 = ssub.s32 %s11, %s18
      %p93 = scmp.eq.s32.totalorder %s92, 0
      %s95 = sadd.s32 %s94, 1
      %s96 = scalar_select %p93, %s94, %s95
      %p99 = pneg %p93
      %p100 = scmp.eq.s32.totalorder %s11, 1
      %p101 = por %p99, %p100
      %p102 = scmp.ne.s32.totalorder %s94, %s97
      %p103 = scmp.eq.s32.totalorder %s11, 0
      %p104 = por %p102, %p103
      %p105 = scmp.ne.s32.totalorder %s94, %s97
      %p106 = scmp.eq.s32.totalorder %s16, 1
      %p107 = por %p105, %p106
      %p108 = scmp.ne.s32.totalorder %s97, %s98
      %p109 = scmp.eq.s32.totalorder %s16, 0
      %p110 = por %p108, %p109
      %p111 = scmp.ne.s32.totalorder %s97, %s98
      %p112 = scmp.eq.s32.totalorder %s17, 1
      %p113 = por %p111, %p112
      %p115 = scmp.ne.s32.totalorder %s98, %s114
      %p116 = scmp.eq.s32.totalorder %s17, 0
      %p117 = por %p115, %p116
      %s118 = ssub.s32 %s11, %s18
      %p119 = scmp.eq.s32.totalorder %s118, 0
      %s121 = sadd.s32 %s120, 1
      %s122 = scalar_select %p119, %s120, %s121
      %p125 = pneg %p119
      %p126 = scmp.eq.s32.totalorder %s11, 1
      %p127 = por %p125, %p126
      %p128 = scmp.ne.s32.totalorder %s120, %s123
      %p129 = scmp.eq.s32.totalorder %s11, 0
      %p130 = por %p128, %p129
      %p131 = scmp.ne.s32.totalorder %s120, %s123
      %p132 = scmp.eq.s32.totalorder %s16, 1
      %p133 = por %p131, %p132
      %p134 = scmp.ne.s32.totalorder %s123, %s124
      %p135 = scmp.eq.s32.totalorder %s16, 0
      %p136 = por %p134, %p135
      %p137 = scmp.ne.s32.totalorder %s123, %s124
      %p138 = scmp.eq.s32.totalorder %s17, 1
      %p139 = por %p137, %p138
      %p141 = scmp.ne.s32.totalorder %s124, %s140
      %p142 = scmp.eq.s32.totalorder %s17, 0
      %p143 = por %p141, %p142
      %p144 = scmp.le.s32.totalorder 1, %s11
      %p145 = scmp.lt.s32.totalorder %s11, 3
      %p146 = pnand %p144, %p145
      %p147 = pneg %p146
      // Predicated region
      $region9: #{convblock_forward.4} parent=5 // pred_check
        _
      $region10: #{convblock_forward.4} parent=5 // pred_check_branch
        %149 = sbr.rel (%p146) target = $region12
      $region11: #{convblock_forward.4} parent=5 // pred_region
        %s150 = ssub.s32 %s11, 1
        // Predicated region
        $region13: #{convblock_forward.4} parent=11 // pred_check
          %p151 = pneg %p32
        $region14: #{convblock_forward.4} parent=11 // pred_check_branch
          %153 = sbr.rel (%p151) target = $region16
        $region15: #{convblock_forward.4} parent=11 // pred_region
          _
        $region16: #{convblock_forward.4} parent=11 // pred_fallthru
          _
      $region12: #{convblock_forward.4} parent=5 // pred_fallthru
        _
      %p154 = scmp.lt.s32.totalorder %s11, 2
      // Predicated region
      $region17: #{convblock_forward.4} parent=5 // pred_check
        %p155 = pneg %p154
      $region18: #{convblock_forward.4} parent=5 // pred_check_branch
        %157 = sbr.rel (%p155) target = $region20
      $region19: #{convblock_forward.4} parent=5 // pred_region
        // Predicated region
        $region21: #{convblock_forward.4} parent=19 // pred_check
          %p158 = pneg %p52
        $region22: #{convblock_forward.4} parent=19 // pred_check_branch
          %160 = sbr.rel (%p158) target = $region24
        $region23: #{convblock_forward.4} parent=19 // pred_region
          %s161 = sand.u32 %s42, 1
          %s162 = sand.u32 %s42, 1
          %s163 = smul.addr %s162, 256
          %s164 = scalar_lea.vmem [#allocation2], %s163
          %s165 = smul.u32 4, %s11
          %s166 = smul.addr %s165, 4
          %s167 = scalar_lea.vmem %s1, %s166
          // Predicated region
          $region25: #{convblock_forward.4} parent=23 // pred_check
            _
          $region26: #{convblock_forward.4} parent=23 // pred_check_branch
            %169 = sbr.rel (0) target = $region28
          $region27: #{convblock_forward.4} parent=23 // pred_region
            // Predicated region
            $region29: #{convblock_forward.4} parent=27 // pred_check
              _
            $region30: #{convblock_forward.4} parent=27 // pred_check_branch
              %171 = sbr.rel (0) target = $region32
            $region31: #{convblock_forward.4} parent=27 // pred_region
              loop: start=0, step=1, limit=1
              $region33: #{convblock_forward.4} parent=31 // loop_pre_header
                _
              $region34: #{convblock_forward.4} parent=31 // loop_header
                %s173 = sphi 0, %s177
                %p174 = scmp.ge.s32.totalorder %s173, 1
                %s178 = sphi %s167, %s167
                %s179 = sphi %s164, %s164
              $region35: #{convblock_forward.4} parent=31 // loop_header_branch
                %176 = sbr.rel (%p174) target = $region39
              $region36: #{convblock_forward.4} parent=31 // loop_body
                %v180 = vld [vmem:[%s178] sm:$0xff]
                %181 = vst [vmem:[%s179] sm:$0xff] %v180
                %v182 = vld [vmem:[%s178 + $0x8] sm:$0xff]
                %183 = vst [vmem:[%s179 + $0x8] sm:$0xff] %v182
                %v184 = vld [vmem:[%s178 + $0x20] sm:$0xff]
                %185 = vst [vmem:[%s179 + $0x10] sm:$0xff] %v184
                %v186 = vld [vmem:[%s178 + $0x28] sm:$0xff]
                %187 = vst [vmem:[%s179 + $0x18] sm:$0xff] %v186
                %v188 = vld [vmem:[%s178 + $0x40] sm:$0xff]
                %189 = vst [vmem:[%s179 + $0x20] sm:$0xff] %v188
                %v190 = vld [vmem:[%s178 + $0x48] sm:$0xff]
                %191 = vst [vmem:[%s179 + $0x28] sm:$0xff] %v190
                %v192 = vld [vmem:[%s178 + $0x60] sm:$0xff]
                %193 = vst [vmem:[%s179 + $0x30] sm:$0xff] %v192
                %v194 = vld [vmem:[%s178 + $0x68] sm:$0xff]
                %195 = vst [vmem:[%s179 + $0x38] sm:$0xff] %v194
                %v196 = vld [vmem:[%s178 + $0x80] sm:$0xff]
                %197 = vst [vmem:[%s179 + $0x40] sm:$0xff] %v196
                %v198 = vld [vmem:[%s178 + $0x88] sm:$0xff]
                %199 = vst [vmem:[%s179 + $0x48] sm:$0xff] %v198
                %v200 = vld [vmem:[%s178 + $0xa0] sm:$0xff]
                %201 = vst [vmem:[%s179 + $0x50] sm:$0xff] %v200
                %v202 = vld [vmem:[%s178 + $0xa8] sm:$0xff]
                %203 = vst [vmem:[%s179 + $0x58] sm:$0xff] %v202
                %v204 = vld [vmem:[%s178 + $0xc0] sm:$0xff]
                %205 = vst [vmem:[%s179 + $0x60] sm:$0xff] %v204
                %v206 = vld [vmem:[%s178 + $0xc8] sm:$0xff]
                %207 = vst [vmem:[%s179 + $0x68] sm:$0xff] %v206
                %v208 = vld [vmem:[%s178 + $0xe0] sm:$0xff]
                %209 = vst [vmem:[%s179 + $0x70] sm:$0xff] %v208
                %v210 = vld [vmem:[%s178 + $0xe8] sm:$0xff]
                %211 = vst [vmem:[%s179 + $0x78] sm:$0xff] %v210
                %v212 = vld [vmem:[%s178 + $0x100] sm:$0xff]
                %213 = vst [vmem:[%s179 + $0x80] sm:$0xff] %v212
                %v214 = vld [vmem:[%s178 + $0x108] sm:$0xff]
                %215 = vst [vmem:[%s179 + $0x88] sm:$0xff] %v214
                %v216 = vld [vmem:[%s178 + $0x120] sm:$0xff]
                %217 = vst [vmem:[%s179 + $0x90] sm:$0xff] %v216
                %v218 = vld [vmem:[%s178 + $0x128] sm:$0xff]
                %219 = vst [vmem:[%s179 + $0x98] sm:$0xff] %v218
                %v220 = vld [vmem:[%s178 + $0x140] sm:$0xff]
                %221 = vst [vmem:[%s179 + $0xa0] sm:$0xff] %v220
                %v222 = vld [vmem:[%s178 + $0x148] sm:$0xff]
                %223 = vst [vmem:[%s179 + $0xa8] sm:$0xff] %v222
                %v224 = vld [vmem:[%s178 + $0x160] sm:$0xff]
                %225 = vst [vmem:[%s179 + $0xb0] sm:$0xff] %v224
                %v226 = vld [vmem:[%s178 + $0x168] sm:$0xff]
                %227 = vst [vmem:[%s179 + $0xb8] sm:$0xff] %v226
                %v228 = vld [vmem:[%s178 + $0x180] sm:$0xff]
                %229 = vst [vmem:[%s179 + $0xc0] sm:$0xff] %v228
                %v230 = vld [vmem:[%s178 + $0x188] sm:$0xff]
                %231 = vst [vmem:[%s179 + $0xc8] sm:$0xff] %v230
                %v232 = vld [vmem:[%s178 + $0x1a0] sm:$0xff]
                %233 = vst [vmem:[%s179 + $0xd0] sm:$0xff] %v232
                %v234 = vld [vmem:[%s178 + $0x1a8] sm:$0xff]
                %235 = vst [vmem:[%s179 + $0xd8] sm:$0xff] %v234
                %v236 = vld [vmem:[%s178 + $0x1c0] sm:$0xff]
                %237 = vst [vmem:[%s179 + $0xe0] sm:$0xff] %v236
                %v238 = vld [vmem:[%s178 + $0x1c8] sm:$0xff]
                %239 = vst [vmem:[%s179 + $0xe8] sm:$0xff] %v238
                %v240 = vld [vmem:[%s178 + $0x1e0] sm:$0xff]
                %241 = vst [vmem:[%s179 + $0xf0] sm:$0xff] %v240
                %v242 = vld [vmem:[%s178 + $0x1e8] sm:$0xff]
                %243 = vst [vmem:[%s179 + $0xf8] sm:$0xff] %v242
              $region37: #{convblock_forward.4} parent=31 // loop_footer
                %s177 = sadd.s32 1, %s173
              $region38: #{convblock_forward.4} parent=31 // loop_footer_branch
                %172 = sbr.rel target = $region34
              $region39: #{convblock_forward.4} parent=31 // loop_exit
                _
            $region32: #{convblock_forward.4} parent=27 // pred_fallthru
              _
            // Predicated region
            $region40: #{convblock_forward.4} parent=27 // pred_check
              _
            $region41: #{convblock_forward.4} parent=27 // pred_check_branch
              %245 = sbr.rel target = $region43
            $region42: #{convblock_forward.4} parent=27 // pred_region
              _
            $region43: #{convblock_forward.4} parent=27 // pred_fallthru
              _
          $region28: #{convblock_forward.4} parent=23 // pred_fallthru
            _
          %246 = vnop
        $region24: #{convblock_forward.4} parent=19 // pred_fallthru
          _
      $region20: #{convblock_forward.4} parent=5 // pred_fallthru
        _
      %p247 = scmp.le.s32.totalorder 1, %s11
      %p248 = scmp.lt.s32.totalorder %s11, 3
      %p249 = pnand %p247, %p248
      %p250 = pneg %p249
      // Predicated region
      $region44: #{convblock_forward.4} parent=5 // pred_check
        _
      $region45: #{convblock_forward.4} parent=5 // pred_check_branch
        %252 = sbr.rel (%p249) target = $region47
      $region46: #{convblock_forward.4} parent=5 // pred_region
        %s253 = ssub.s32 %s11, 1
        %s254 = sand.u32 %s45, 1
        %s255 = sand.u32 %s45, 1
        %s256 = smul.addr %s255, 256
        %s257 = scalar_lea.vmem [#allocation2], %s256
        // Predicated region
        $region48: #{convblock_forward.4} parent=46 // pred_check
          %p258 = pneg %p58
        $region49: #{convblock_forward.4} parent=46 // pred_check_branch
          %260 = sbr.rel (%p258) target = $region51
        $region50: #{convblock_forward.4} parent=46 // pred_region
          _
        $region51: #{convblock_forward.4} parent=46 // pred_fallthru
          _
        %p261 = pneg %p32
        %p262 = pneg %p29
        %s263 = sand.u32 %s45, 1
        %s264 = sand.u32 %s45, 1
        %s265 = smul.addr %s264, 256
        %s266 = scalar_lea.vmem [#allocation2], %s265
        %p267 = pneg %p58
        %p268 = pneg %p55
        %p269 = pneg %p84
        %p270 = pneg %p81
        %s271 = smul.u32 4, %s16
        %p272 = scmp.lt.s32.totalorder %s271, 7
        %s273 = scalar_select %p272, %s271, 7
        %s274 = smul.addr %s273, 8
        %s275 = scalar_lea.vmem %s2, %s274
        %p276 = pneg %p110
        %p277 = pneg %p107
        %p278 = scmp.lt.s32.totalorder %s16, 1
        %s279 = scalar_select %p278, %s16, 1
        %s280 = smul.addr %s279, 8
        %s281 = scalar_lea.vmem %s3, %s280
        %p282 = pneg %p136
        %p283 = pneg %p133
        %p284 = scmp.lt.s32.totalorder %s16, 1
        %s285 = scalar_select %p284, %s16, 1
        %s286 = smul.addr %s285, 8
        %s287 = scalar_lea.vmem %s4, %s286
        %s288 = smul.u32 4, %s16
        %s289 = smul.u32 4, %s16
        %p290 = scmp.lt.s32.totalorder %s289, 7
        %s291 = scalar_select %p290, %s289, 7
        %s292 = smul.addr %s291, 8
        %s293 = scalar_lea.vmem %s2, %s292
        %s294 = smul.u32 4, %s16
        %p295 = scmp.lt.s32.totalorder %s16, 1
        %s296 = scalar_select %p295, %s16, 1
        %s297 = smul.addr %s296, 8
        %s298 = scalar_lea.vmem %s3, %s297
        %p299 = scmp.lt.s32.totalorder %s16, 1
        %s300 = scalar_select %p299, %s16, 1
        %s301 = smul.addr %s300, 8
        %s302 = scalar_lea.vmem %s4, %s301
        %v304 = vld [vmem:[%s0] sm:$0xf]
        %v305 = vld [vmem:[%s257] sm:$0xff]
        %v306 = vld [vmem:[%s257 + $0x8] sm:$0xff]
        %v307 = vld [vmem:[%s257 + $0x10] sm:$0xff]
        %v308 = vld [vmem:[%s257 + $0x18] sm:$0xff]
        %v309 = vld [vmem:[%s257 + $0x20] sm:$0xff]
        %v310 = vld [vmem:[%s257 + $0x28] sm:$0xff]
        %v311 = vld [vmem:[%s257 + $0x30] sm:$0xff]
        %v312 = vld [vmem:[%s257 + $0x38] sm:$0xff]
        %v313 = vld [vmem:[%s257 + $0x40] sm:$0xff]
        %v314 = vld [vmem:[%s257 + $0x48] sm:$0xff]
        %v315 = vld [vmem:[%s257 + $0x50] sm:$0xff]
        %v316 = vld [vmem:[%s257 + $0x58] sm:$0xff]
        %v317 = vld [vmem:[%s257 + $0x60] sm:$0xff]
        %v318 = vld [vmem:[%s257 + $0x68] sm:$0xff]
        %v319 = vld [vmem:[%s257 + $0x70] sm:$0xff]
        %v320 = vld [vmem:[%s257 + $0x78] sm:$0xff]
        %v321 = vld [vmem:[%s257 + $0x80] sm:$0xff]
        %v322 = vld [vmem:[%s257 + $0x88] sm:$0xff]
        %v323 = vld [vmem:[%s257 + $0x90] sm:$0xff]
        %v324 = vld [vmem:[%s257 + $0x98] sm:$0xff]
        %v325 = vld [vmem:[%s257 + $0xa0] sm:$0xff]
        %v326 = vld [vmem:[%s257 + $0xa8] sm:$0xff]
        %v327 = vld [vmem:[%s257 + $0xb0] sm:$0xff]
        %v328 = vld [vmem:[%s257 + $0xb8] sm:$0xff]
        %v329 = vld [vmem:[%s257 + $0xc0] sm:$0xff]
        %v330 = vld [vmem:[%s257 + $0xc8] sm:$0xff]
        %v331 = vld [vmem:[%s257 + $0xd0] sm:$0xff]
        %v332 = vld [vmem:[%s257 + $0xd8] sm:$0xff]
        %v333 = vld [vmem:[%s257 + $0xe0] sm:$0xff]
        %v334 = vld [vmem:[%s257 + $0xe8] sm:$0xff]
        %v335 = vld [vmem:[%s257 + $0xf0] sm:$0xff]
        %v336 = vld [vmem:[%s257 + $0xf8] sm:$0xff]
        %v369 = vunpack.c.l.b16 %v305
        %v370 = vunpack.c.h.b16 %v305
        %v371 = vunpack.c.l.b16 %v306
        %v372 = vunpack.c.h.b16 %v306
        %v373 = vunpack.c.l.b16 %v307
        %v374 = vunpack.c.h.b16 %v307
        %v375 = vunpack.c.l.b16 %v308
        %v376 = vunpack.c.h.b16 %v308
        %v377 = vunpack.c.l.b16 %v309
        %v378 = vunpack.c.h.b16 %v309
        %v379 = vunpack.c.l.b16 %v310
        %v380 = vunpack.c.h.b16 %v310
        %v381 = vunpack.c.l.b16 %v311
        %v382 = vunpack.c.h.b16 %v311
        %v383 = vunpack.c.l.b16 %v312
        %v384 = vunpack.c.h.b16 %v312
        %v385 = vunpack.c.l.b16 %v313
        %v386 = vunpack.c.h.b16 %v313
        %v387 = vunpack.c.l.b16 %v314
        %v388 = vunpack.c.h.b16 %v314
        %v389 = vunpack.c.l.b16 %v315
        %v390 = vunpack.c.h.b16 %v315
        %v391 = vunpack.c.l.b16 %v316
        %v392 = vunpack.c.h.b16 %v316
        %v393 = vunpack.c.l.b16 %v317
        %v394 = vunpack.c.h.b16 %v317
        %v395 = vunpack.c.l.b16 %v318
        %v396 = vunpack.c.h.b16 %v318
        %v397 = vunpack.c.l.b16 %v319
        %v398 = vunpack.c.h.b16 %v319
        %v399 = vunpack.c.l.b16 %v320
        %v400 = vunpack.c.h.b16 %v320
        %v401 = vunpack.c.l.b16 %v321
        %v402 = vunpack.c.h.b16 %v321
        %v403 = vunpack.c.l.b16 %v322
        %v404 = vunpack.c.h.b16 %v322
        %v405 = vunpack.c.l.b16 %v323
        %v406 = vunpack.c.h.b16 %v323
        %v407 = vunpack.c.l.b16 %v324
        %v408 = vunpack.c.h.b16 %v324
        %v409 = vunpack.c.l.b16 %v325
        %v410 = vunpack.c.h.b16 %v325
        %v411 = vunpack.c.l.b16 %v326
        %v412 = vunpack.c.h.b16 %v326
        %v413 = vunpack.c.l.b16 %v327
        %v414 = vunpack.c.h.b16 %v327
        %v415 = vunpack.c.l.b16 %v328
        %v416 = vunpack.c.h.b16 %v328
        %v417 = vunpack.c.l.b16 %v329
        %v418 = vunpack.c.h.b16 %v329
        %v419 = vunpack.c.l.b16 %v330
        %v420 = vunpack.c.h.b16 %v330
        %v421 = vunpack.c.l.b16 %v331
        %v422 = vunpack.c.h.b16 %v331
        %v423 = vunpack.c.l.b16 %v332
        %v424 = vunpack.c.h.b16 %v332
        %v425 = vunpack.c.l.b16 %v333
        %v426 = vunpack.c.h.b16 %v333
        %v427 = vunpack.c.l.b16 %v334
        %v428 = vunpack.c.h.b16 %v334
        %v429 = vunpack.c.l.b16 %v335
        %v430 = vunpack.c.h.b16 %v335
        %v431 = vunpack.c.l.b16 %v336
        %v432 = vunpack.c.h.b16 %v336
        %v433 = vpack.c.b16 %v373, %v369
        %v434 = vpack.c.b16 %v374, %v370
        %v435 = vpack.c.b16 %v375, %v371
        %v436 = vpack.c.b16 %v376, %v372
        %v437 = vpack.c.b16 %v381, %v377
        %v438 = vpack.c.b16 %v382, %v378
        %v439 = vpack.c.b16 %v383, %v379
        %v440 = vpack.c.b16 %v384, %v380
        %v441 = vpack.c.b16 %v389, %v385
        %v442 = vpack.c.b16 %v390, %v386
        %v443 = vpack.c.b16 %v391, %v387
        %v444 = vpack.c.b16 %v392, %v388
        %v445 = vpack.c.b16 %v397, %v393
        %v446 = vpack.c.b16 %v398, %v394
        %v447 = vpack.c.b16 %v399, %v395
        %v448 = vpack.c.b16 %v400, %v396
        %v449 = vpack.c.b16 %v405, %v401
        %v450 = vpack.c.b16 %v406, %v402
        %v451 = vpack.c.b16 %v407, %v403
        %v452 = vpack.c.b16 %v408, %v404
        %v453 = vpack.c.b16 %v413, %v409
        %v454 = vpack.c.b16 %v414, %v410
        %v455 = vpack.c.b16 %v415, %v411
        %v456 = vpack.c.b16 %v416, %v412
        %v457 = vpack.c.b16 %v421, %v417
        %v458 = vpack.c.b16 %v422, %v418
        %v459 = vpack.c.b16 %v423, %v419
        %v460 = vpack.c.b16 %v424, %v420
        %v461 = vpack.c.b16 %v429, %v425
        %v462 = vpack.c.b16 %v430, %v426
        %v463 = vpack.c.b16 %v431, %v427
        %v464 = vpack.c.b16 %v432, %v428
        %497 = vmatprep.subr.bf16.mxu0 %v434
        %498 = vmatpush1.bf16.msra.mxu0 %v433
        %499 = vmatprep.subr.bf16.mxu0 %v438
        %500 = vmatpush1.bf16.msra.mxu0 %v437
        %501 = vmatprep.subr.bf16.mxu0 %v442
        %502 = vmatpush1.bf16.msra.mxu0 %v441
        %503 = vmatprep.subr.bf16.mxu0 %v446
        %504 = vmatpush1.bf16.msra.mxu0 %v445
        %505 = vmatprep.subr.bf16.mxu0 %v450
        %506 = vmatpush1.bf16.msra.mxu0 %v449
        %507 = vmatprep.subr.bf16.mxu0 %v454
        %508 = vmatpush1.bf16.msra.mxu0 %v453
        %509 = vmatprep.subr.bf16.mxu0 %v458
        %510 = vmatpush1.bf16.msra.mxu0 %v457
        %511 = vmatprep.subr.bf16.mxu0 %v462
        %512 = vmatpush1.bf16.msra.mxu0 %v461
        %513 = vmatprep.subr.bf16.mxu0 0
        %514 = vmatpush1.bf16.msra.mxu0 0
        %515 = vmatprep.subr.bf16.mxu0 0
        %516 = vmatpush1.bf16.msra.mxu0 0
        %517 = vmatprep.subr.bf16.mxu0 0
        %518 = vmatpush1.bf16.msra.mxu0 0
        %519 = vmatprep.subr.bf16.mxu0 0
        %520 = vmatpush1.bf16.msra.mxu0 0
        %521 = vmatprep.subr.bf16.mxu0 0
        %522 = vmatpush1.bf16.msra.mxu0 0
        %523 = vmatprep.subr.bf16.mxu0 0
        %524 = vmatpush1.bf16.msra.mxu0 0
        %525 = vmatprep.subr.bf16.mxu0 0
        %526 = vmatpush1.bf16.msra.mxu0 0
        %527 = vmatprep.subr.bf16.mxu0 0
        %528 = vmatpush1.bf16.msra.mxu0 0
        %529 = vmatprep.mubr.bf16.mxu0 0
        %530 = vmatmul.mubr.bf16.gmra.mrb[0].mxu0 %v304
        %v531 = vpop.f32.mrb[0].mxu0
        %v532 = vadd.f32 0.0, %v531
        %v533 = vpop.f32.mrb[0].mxu0
        %v534 = vadd.f32 0.0, %v533
        %v535 = vpop.f32.mrb[0].mxu0
        %v536 = vpop.f32.mrb[0].mxu0
        %537 = vdwg.mxu0
        %538 = vmatprep.subr.bf16.mxu0 %v436
        %539 = vmatpush1.bf16.msra.mxu0 %v435
        %540 = vmatprep.subr.bf16.mxu0 %v440
        %541 = vmatpush1.bf16.msra.mxu0 %v439
        %542 = vmatprep.subr.bf16.mxu0 %v444
        %543 = vmatpush1.bf16.msra.mxu0 %v443
        %544 = vmatprep.subr.bf16.mxu0 %v448
        %545 = vmatpush1.bf16.msra.mxu0 %v447
        %546 = vmatprep.subr.bf16.mxu0 %v452
        %547 = vmatpush1.bf16.msra.mxu0 %v451
        %548 = vmatprep.subr.bf16.mxu0 %v456
        %549 = vmatpush1.bf16.msra.mxu0 %v455
        %550 = vmatprep.subr.bf16.mxu0 %v460
        %551 = vmatpush1.bf16.msra.mxu0 %v459
        %552 = vmatprep.subr.bf16.mxu0 %v464
        %553 = vmatpush1.bf16.msra.mxu0 %v463
        %554 = vmatprep.subr.bf16.mxu0 0
        %555 = vmatpush1.bf16.msra.mxu0 0
        %556 = vmatprep.subr.bf16.mxu0 0
        %557 = vmatpush1.bf16.msra.mxu0 0
        %558 = vmatprep.subr.bf16.mxu0 0
        %559 = vmatpush1.bf16.msra.mxu0 0
        %560 = vmatprep.subr.bf16.mxu0 0
        %561 = vmatpush1.bf16.msra.mxu0 0
        %562 = vmatprep.subr.bf16.mxu0 0
        %563 = vmatpush1.bf16.msra.mxu0 0
        %564 = vmatprep.subr.bf16.mxu0 0
        %565 = vmatpush1.bf16.msra.mxu0 0
        %566 = vmatprep.subr.bf16.mxu0 0
        %567 = vmatpush1.bf16.msra.mxu0 0
        %568 = vmatprep.subr.bf16.mxu0 0
        %569 = vmatpush1.bf16.msra.mxu0 0
        %570 = vmatprep.mubr.bf16.mxu0 0
        %571 = vmatmul.mubr.bf16.gmra.mrb[0].mxu0 %v304
        %v572 = vpop.f32.mrb[0].mxu0
        %v573 = vadd.f32 0.0, %v572
        %v574 = vpop.f32.mrb[0].mxu0
        %v575 = vadd.f32 0.0, %v574
        %v576 = vpop.f32.mrb[0].mxu0
        %v577 = vpop.f32.mrb[0].mxu0
        %578 = vdwg.mxu0
        %579 = vst [vmem:[%s293] sm:$0xff] %v532
        %580 = vst [vmem:[%s293 + $0x8] sm:$0xff] %v534
        %581 = vst [vmem:[%s293 + $0x10] sm:$0xff] %v573
        %582 = vst [vmem:[%s293 + $0x18] sm:$0xff] %v575
        %v583 = vadd.f32 %v532, %v534
        %v584 = vadd.f32 %v583, %v573
        %v585 = vadd.f32 %v584, %v575
        %586 = vadd.xlane.f32.xlu0 %v585
        %v587 = vpop.xlane.xlu0 %586
        %vm588 = vcmask 7168
        %589 = vst.msk [vmem:[%s298] sm:$0xff] %vm588, %v587
        %v590 = vmul.f32 %v532, %v532
        %v591 = vmul.f32 %v534, %v534
        %v592 = vmul.f32 %v573, %v573
        %v593 = vmul.f32 %v575, %v575
        %v594 = vadd.f32 %v590, %v591
        %v595 = vadd.f32 %v594, %v592
        %v596 = vadd.f32 %v595, %v593
        %597 = vadd.xlane.f32.xlu0 %v596
        %v598 = vpop.xlane.xlu0 %597
        %599 = vst.msk [vmem:[%s302] sm:$0xff] %vm588, %v598
        %s600 = smul.u32 4, %s16
        %p601 = scmp.lt.s32.totalorder %s600, 7
        %s602 = scalar_select %p601, %s600, 7
        %s603 = smul.addr %s602, 8
        %s604 = scalar_lea.vmem %s2, %s603
        %p605 = scmp.lt.s32.totalorder %s16, 1
        %s606 = scalar_select %p605, %s16, 1
        %s607 = smul.addr %s606, 8
        %s608 = scalar_lea.vmem %s3, %s607
        %p609 = scmp.lt.s32.totalorder %s16, 1
        %s610 = scalar_select %p609, %s16, 1
        %s611 = smul.addr %s610, 8
        %s612 = scalar_lea.vmem %s4, %s611
        // Predicated region
        $region52: #{convblock_forward.4} parent=46 // pred_check
          %p613 = pneg %p81
        $region53: #{convblock_forward.4} parent=46 // pred_check_branch
          %615 = sbr.rel (%p613) target = $region55
        $region54: #{convblock_forward.4} parent=46 // pred_region
          %s616 = smul.u32 4, %s16
        $region55: #{convblock_forward.4} parent=46 // pred_fallthru
          _
        // Predicated region
        $region56: #{convblock_forward.4} parent=46 // pred_check
          %p617 = pneg %p107
        $region57: #{convblock_forward.4} parent=46 // pred_check_branch
          %619 = sbr.rel (%p617) target = $region59
        $region58: #{convblock_forward.4} parent=46 // pred_region
          _
        $region59: #{convblock_forward.4} parent=46 // pred_fallthru
          _
        // Predicated region
        $region60: #{convblock_forward.4} parent=46 // pred_check
          %p620 = pneg %p133
        $region61: #{convblock_forward.4} parent=46 // pred_check_branch
          %622 = sbr.rel (%p620) target = $region63
        $region62: #{convblock_forward.4} parent=46 // pred_region
          _
        $region63: #{convblock_forward.4} parent=46 // pred_fallthru
          _
      $region47: #{convblock_forward.4} parent=5 // pred_fallthru
        _
      %p623 = scmp.le.s32.totalorder 2, %s11
      // Predicated region
      $region64: #{convblock_forward.4} parent=5 // pred_check
        %p624 = pneg %p623
      $region65: #{convblock_forward.4} parent=5 // pred_check_branch
        %626 = sbr.rel (%p624) target = $region67
      $region66: #{convblock_forward.4} parent=5 // pred_region
        %s627 = ssub.s32 %s11, 2
        // Predicated region
        $region68: #{convblock_forward.4} parent=66 // pred_check
          %p628 = pneg %p87
        $region69: #{convblock_forward.4} parent=66 // pred_check_branch
          %630 = sbr.rel (%p628) target = $region71
        $region70: #{convblock_forward.4} parent=66 // pred_region
          %s631 = smul.u32 4, %s17
          %p632 = scmp.lt.s32.totalorder %s631, 7
          %s633 = scalar_select %p632, %s631, 7
          %s634 = smul.addr %s633, 8
          %s635 = scalar_lea.vmem %s2, %s634
        $region71: #{convblock_forward.4} parent=66 // pred_fallthru
          _
        // Predicated region
        $region72: #{convblock_forward.4} parent=66 // pred_check
          %p636 = pneg %p113
        $region73: #{convblock_forward.4} parent=66 // pred_check_branch
          %638 = sbr.rel (%p636) target = $region75
        $region74: #{convblock_forward.4} parent=66 // pred_region
          %p639 = scmp.lt.s32.totalorder %s17, 1
          %s640 = scalar_select %p639, %s17, 1
          %s641 = smul.addr %s640, 8
          %s642 = scalar_lea.vmem %s3, %s641
        $region75: #{convblock_forward.4} parent=66 // pred_fallthru
          _
        // Predicated region
        $region76: #{convblock_forward.4} parent=66 // pred_check
          %p643 = pneg %p139
        $region77: #{convblock_forward.4} parent=66 // pred_check_branch
          %645 = sbr.rel (%p643) target = $region79
        $region78: #{convblock_forward.4} parent=66 // pred_region
          %p646 = scmp.lt.s32.totalorder %s17, 1
          %s647 = scalar_select %p646, %s17, 1
          %s648 = smul.addr %s647, 8
          %s649 = scalar_lea.vmem %s4, %s648
        $region79: #{convblock_forward.4} parent=66 // pred_fallthru
          _
      $region67: #{convblock_forward.4} parent=5 // pred_fallthru
        _
    $region6: #{convblock_forward.4} parent=1 // loop_footer
      %s15 = sadd.s32 1, %s11
    $region7: #{convblock_forward.4} parent=1 // loop_footer_branch
      %10 = sbr.rel target = $region3
    $region8: #{convblock_forward.4} parent=1 // loop_exit
      _

// kernel: convblock_forward.5
$region0: #{convblock_forward.5}
  #allocation0 [shape = 'u32[]', space=smem, size = 0x4, offset = 0x4, fixed_abs, tag = 'smem constant byte address 0x4 - core index']
  #allocation1 [shape = 'u32[144,128]{1,0:T(1,128)}', space=vmem, size = 0x12000, scoped, tag = 'internal scratch']
  %s0 = inlined_call_operand.vmem [shape: f32[8,1], index: 0, kind: input, shape index: {}]
  %s1 = inlined_call_operand.vmem [shape: f32[8,1], index: 1, kind: input, shape index: {}]
  %s2 = inlined_call_operand.vmem [shape: f32[8,1024], index: 2, kind: input, shape index: {}]
  %s3 = inlined_call_operand.vmem [shape: f32[8,1024], index: 3, kind: output, shape index: {}]
  %s4 = sld [smem:[#allocation0]]
  $region45: #{convblock_forward.5} parent=0
    _
  %s6 = ssub.s32 1, %s4
  %s7 = scalar_select 0, %s6, %s4
  loop: start=0, step=1, limit=4
  $region2: #{convblock_forward.5} parent=0 // loop_pre_header
    _
  $region3: #{convblock_forward.5} parent=0 // loop_header
    %s9 = sphi 0, %s13
    %p10 = scmp.ge.s32.totalorder %s9, 4
    %s17 = sphi 0, %s17
    %s19 = sphi 0, %s17
    %s20 = sphi 0, %s19
    %s34 = sphi 0, %s20
    %s38 = sphi 0, %s38
    %s40 = sphi 0, %s38
    %s41 = sphi 0, %s40
    %s55 = sphi 0, %s41
    %s61 = sphi 0, %s63
    %s64 = sphi 0, %s61
    %s65 = sphi 0, %s64
    %s81 = sphi 0, %s65
    %s87 = sphi 0, %s89
    %s90 = sphi 0, %s87
    %s91 = sphi 0, %s90
    %s107 = sphi 0, %s91
  $region4: #{convblock_forward.5} parent=0 // loop_header_branch
    %12 = sbr.rel (%p10) target = $region8
  $region5: #{convblock_forward.5} parent=0 // loop_body
    %s14 = ssub.s32 %s9, 1
    %s15 = ssub.s32 %s9, 2
    %s16 = sadd.s32 %s9, 1
    %s18 = sadd.s32 %s17, 1
    %p21 = scmp.eq.s32.totalorder %s9, 1
    %p22 = scmp.ne.s32.totalorder %s17, %s19
    %p23 = scmp.eq.s32.totalorder %s9, 0
    %p24 = por %p22, %p23
    %p25 = scmp.ne.s32.totalorder %s17, %s19
    %p26 = scmp.eq.s32.totalorder %s14, 1
    %p27 = por %p25, %p26
    %p28 = scmp.ne.s32.totalorder %s19, %s20
    %p29 = scmp.eq.s32.totalorder %s14, 0
    %p30 = por %p28, %p29
    %p31 = scmp.ne.s32.totalorder %s19, %s20
    %p32 = scmp.eq.s32.totalorder %s15, 1
    %p33 = por %p31, %p32
    %p35 = scmp.ne.s32.totalorder %s20, %s34
    %p36 = scmp.eq.s32.totalorder %s15, 0
    %p37 = por %p35, %p36
    %s39 = sadd.s32 %s38, 1
    %p42 = scmp.eq.s32.totalorder %s9, 1
    %p43 = scmp.ne.s32.totalorder %s38, %s40
    %p44 = scmp.eq.s32.totalorder %s9, 0
    %p45 = por %p43, %p44
    %p46 = scmp.ne.s32.totalorder %s38, %s40
    %p47 = scmp.eq.s32.totalorder %s14, 1
    %p48 = por %p46, %p47
    %p49 = scmp.ne.s32.totalorder %s40, %s41
    %p50 = scmp.eq.s32.totalorder %s14, 0
    %p51 = por %p49, %p50
    %p52 = scmp.ne.s32.totalorder %s40, %s41
    %p53 = scmp.eq.s32.totalorder %s15, 1
    %p54 = por %p52, %p53
    %p56 = scmp.ne.s32.totalorder %s41, %s55
    %p57 = scmp.eq.s32.totalorder %s15, 0
    %p58 = por %p56, %p57
    %s59 = ssub.s32 %s9, %s16
    %p60 = scmp.eq.s32.totalorder %s59, 0
    %s62 = sadd.s32 %s61, 1
    %s63 = scalar_select %p60, %s61, %s62
    %p66 = pneg %p60
    %p67 = scmp.eq.s32.totalorder %s9, 1
    %p68 = por %p66, %p67
    %p69 = scmp.ne.s32.totalorder %s61, %s64
    %p70 = scmp.eq.s32.totalorder %s9, 0
    %p71 = por %p69, %p70
    %p72 = scmp.ne.s32.totalorder %s61, %s64
    %p73 = scmp.eq.s32.totalorder %s14, 1
    %p74 = por %p72, %p73
    %p75 = scmp.ne.s32.totalorder %s64, %s65
    %p76 = scmp.eq.s32.totalorder %s14, 0
    %p77 = por %p75, %p76
    %p78 = scmp.ne.s32.totalorder %s64, %s65
    %p79 = scmp.eq.s32.totalorder %s15, 1
    %p80 = por %p78, %p79
    %p82 = scmp.ne.s32.totalorder %s65, %s81
    %p83 = scmp.eq.s32.totalorder %s15, 0
    %p84 = por %p82, %p83
    %s85 = ssub.s32 %s9, %s16
    %p86 = scmp.eq.s32.totalorder %s85, 0
    %s88 = sadd.s32 %s87, 1
    %s89 = scalar_select %p86, %s87, %s88
    %p92 = pneg %p86
    %p93 = scmp.eq.s32.totalorder %s9, 1
    %p94 = por %p92, %p93
    %p95 = scmp.ne.s32.totalorder %s87, %s90
    %p96 = scmp.eq.s32.totalorder %s9, 0
    %p97 = por %p95, %p96
    %p98 = scmp.ne.s32.totalorder %s87, %s90
    %p99 = scmp.eq.s32.totalorder %s14, 1
    %p100 = por %p98, %p99
    %p101 = scmp.ne.s32.totalorder %s90, %s91
    %p102 = scmp.eq.s32.totalorder %s14, 0
    %p103 = por %p101, %p102
    %p104 = scmp.ne.s32.totalorder %s90, %s91
    %p105 = scmp.eq.s32.totalorder %s15, 1
    %p106 = por %p104, %p105
    %p108 = scmp.ne.s32.totalorder %s91, %s107
    %p109 = scmp.eq.s32.totalorder %s15, 0
    %p110 = por %p108, %p109
    %p111 = scmp.le.s32.totalorder 1, %s9
    %p112 = scmp.lt.s32.totalorder %s9, 3
    %p113 = pnand %p111, %p112
    %p114 = pneg %p113
    // Predicated region
    $region9: #{convblock_forward.5} parent=5 // pred_check
      _
    $region10: #{convblock_forward.5} parent=5 // pred_check_branch
      %116 = sbr.rel (%p113) target = $region12
    $region11: #{convblock_forward.5} parent=5 // pred_region
      %s117 = ssub.s32 %s9, 1
      // Predicated region
      $region13: #{convblock_forward.5} parent=11 // pred_check
        %p118 = pneg %p30
      $region14: #{convblock_forward.5} parent=11 // pred_check_branch
        %120 = sbr.rel (%p118) target = $region16
      $region15: #{convblock_forward.5} parent=11 // pred_region
        _
      $region16: #{convblock_forward.5} parent=11 // pred_fallthru
        _
      // Predicated region
      $region17: #{convblock_forward.5} parent=11 // pred_check
        %p121 = pneg %p51
      $region18: #{convblock_forward.5} parent=11 // pred_check_branch
        %123 = sbr.rel (%p121) target = $region20
      $region19: #{convblock_forward.5} parent=11 // pred_region
        _
      $region20: #{convblock_forward.5} parent=11 // pred_fallthru
        _
    $region12: #{convblock_forward.5} parent=5 // pred_fallthru
      _
    %p124 = scmp.lt.s32.totalorder %s9, 2
    // Predicated region
    $region21: #{convblock_forward.5} parent=5 // pred_check
      %p125 = pneg %p124
    $region22: #{convblock_forward.5} parent=5 // pred_check_branch
      %127 = sbr.rel (%p125) target = $region24
    $region23: #{convblock_forward.5} parent=5 // pred_region
      // Predicated region
      $region25: #{convblock_forward.5} parent=23 // pred_check
        %p128 = pneg %p71
      $region26: #{convblock_forward.5} parent=23 // pred_check_branch
        %130 = sbr.rel (%p128) target = $region28
      $region27: #{convblock_forward.5} parent=23 // pred_region
        %s131 = smul.u32 4, %s9
        %p132 = scmp.lt.s32.totalorder %s131, 7
        %s133 = scalar_select %p132, %s131, 7
        %s134 = smul.addr %s133, 8
        %s135 = scalar_lea.vmem %s2, %s134
        %s136 = smul.u32 4, %s9
      $region28: #{convblock_forward.5} parent=23 // pred_fallthru
        _
    $region24: #{convblock_forward.5} parent=5 // pred_fallthru
      _
    %p137 = scmp.le.s32.totalorder 1, %s9
    %p138 = scmp.lt.s32.totalorder %s9, 3
    %p139 = pnand %p137, %p138
    %p140 = pneg %p139
    // Predicated region
    $region29: #{convblock_forward.5} parent=5 // pred_check
      _
    $region30: #{convblock_forward.5} parent=5 // pred_check_branch
      %142 = sbr.rel (%p139) target = $region32
    $region31: #{convblock_forward.5} parent=5 // pred_region
      %s143 = ssub.s32 %s9, 1
      %p144 = pneg %p30
      %p145 = pneg %p27
      %p146 = pneg %p51
      %p147 = pneg %p48
      %s148 = smul.u32 4, %s14
      %p149 = scmp.lt.s32.totalorder %s148, 7
      %s150 = scalar_select %p149, %s148, 7
      %s151 = smul.addr %s150, 8
      %s152 = scalar_lea.vmem %s2, %s151
      %p153 = pneg %p77
      %p154 = pneg %p74
      %p155 = pneg %p103
      %p156 = pneg %p100
      %s157 = smul.u32 4, %s14
      %p158 = scmp.lt.s32.totalorder %s157, 7
      %s159 = scalar_select %p158, %s157, 7
      %s160 = smul.addr %s159, 8
      %s161 = scalar_lea.vmem %s3, %s160
      %s162 = smul.u32 4, %s14
      %p163 = scmp.lt.s32.totalorder %s162, 7
      %s164 = scalar_select %p163, %s162, 7
      %s165 = smul.addr %s164, 8
      %s166 = scalar_lea.vmem %s2, %s165
      %s167 = smul.u32 4, %s14
      %s168 = smul.u32 4, %s14
      %p169 = scmp.lt.s32.totalorder %s168, 7
      %s170 = scalar_select %p169, %s168, 7
      %s171 = smul.addr %s170, 8
      %s172 = scalar_lea.vmem %s3, %s171
      %s173 = smul.u32 4, %s14
      %v174 = vld [vmem:[%s166] sm:$0xff]
      %v175 = vld [vmem:[%s166 + $0x8] sm:$0xff]
      %v176 = vld [vmem:[%s166 + $0x10] sm:$0xff]
      %v177 = vld [vmem:[%s166 + $0x18] sm:$0xff]
      %v178 = vld [vmem:[%s0] sm:$0xff]
      %180 = vset.pattern.permute.xlu0 0
      %181 = vperm.xlu0 %180, %v178
      %v182 = vpop.permute.xlu0 %181
      %v184 = vmul.f32 %v174, %v182
      %v185 = vmul.f32 %v175, %v182
      %v186 = vmul.f32 %v176, %v182
      %v187 = vmul.f32 %v177, %v182
      %v188 = vld [vmem:[%s1] sm:$0xff]
      %190 = vset.pattern.permute.xlu0 0
      %191 = vperm.xlu0 %190, %v188
      %v192 = vpop.permute.xlu0 %191
      %v194 = vadd.f32 %v184, %v192
      %v195 = vadd.f32 %v185, %v192
      %v196 = vadd.f32 %v186, %v192
      %v197 = vadd.f32 %v187, %v192
      %v198 = vmax.f32 %v194, 0.0
      %v199 = vmax.f32 %v195, 0.0
      %v200 = vmax.f32 %v196, 0.0
      %v201 = vmax.f32 %v197, 0.0
      %202 = vst [vmem:[%s172] sm:$0xff] %v198
      %203 = vst [vmem:[%s172 + $0x8] sm:$0xff] %v199
      %204 = vst [vmem:[%s172 + $0x10] sm:$0xff] %v200
      %205 = vst [vmem:[%s172 + $0x18] sm:$0xff] %v201
      %s206 = smul.u32 4, %s14
      %p207 = scmp.lt.s32.totalorder %s206, 7
      %s208 = scalar_select %p207, %s206, 7
      %s209 = smul.addr %s208, 8
      %s210 = scalar_lea.vmem %s3, %s209
      // Predicated region
      $region33: #{convblock_forward.5} parent=31 // pred_check
        %p211 = pneg %p100
      $region34: #{convblock_forward.5} parent=31 // pred_check_branch
        %213 = sbr.rel (%p211) target = $region36
      $region35: #{convblock_forward.5} parent=31 // pred_region
        %s214 = smul.u32 4, %s14
      $region36: #{convblock_forward.5} parent=31 // pred_fallthru
        _
    $region32: #{convblock_forward.5} parent=5 // pred_fallthru
      _
    %p215 = scmp.le.s32.totalorder 2, %s9
    // Predicated region
    $region37: #{convblock_forward.5} parent=5 // pred_check
      %p216 = pneg %p215
    $region38: #{convblock_forward.5} parent=5 // pred_check_branch
      %218 = sbr.rel (%p216) target = $region40
    $region39: #{convblock_forward.5} parent=5 // pred_region
      %s219 = ssub.s32 %s9, 2
      // Predicated region
      $region41: #{convblock_forward.5} parent=39 // pred_check
        %p220 = pneg %p106
      $region42: #{convblock_forward.5} parent=39 // pred_check_branch
        %222 = sbr.rel (%p220) target = $region44
      $region43: #{convblock_forward.5} parent=39 // pred_region
        %s223 = smul.u32 4, %s15
        %p224 = scmp.lt.s32.totalorder %s223, 7
        %s225 = scalar_select %p224, %s223, 7
        %s226 = smul.addr %s225, 8
        %s227 = scalar_lea.vmem %s3, %s226
      $region44: #{convblock_forward.5} parent=39 // pred_fallthru
        _
    $region40: #{convblock_forward.5} parent=5 // pred_fallthru
      _
  $region6: #{convblock_forward.5} parent=0 // loop_footer
    %s13 = sadd.s32 1, %s9
  $region7: #{convblock_forward.5} parent=0 // loop_footer_branch
    %8 = sbr.rel target = $region3
  $region8: #{convblock_forward.5} parent=0 // loop_exit
    _

// kernel: convblock_forward.6
$region0: #{convblock_forward.6}
  #allocation0 [shape = 'u32[]', space=smem, size = 0x4, offset = 0x4, fixed_abs, tag = 'smem constant byte address 0x4 - core index']
  #allocation1 [shape = 'u32[144,128]{1,0:T(1,128)}', space=vmem, size = 0x12000, scoped, tag = 'internal scratch']
  %s0 = inlined_call_operand.vmem [shape: bf16[8,224], index: 0, kind: input, shape index: {}]
  %s1 = inlined_call_operand.vmem [shape: bf16[224,1024], index: 1, kind: input, shape index: {}]
  %s2 = inlined_call_operand.vmem [shape: f32[8,1024], index: 2, kind: output, shape index: {0}]
  %s3 = inlined_call_operand.vmem [shape: f32[2,8,1], index: 3, kind: output, shape index: {1}]
  %s4 = inlined_call_operand.vmem [shape: f32[2,8,1], index: 4, kind: output, shape index: {2}]
  %5 = xla_tuple %s2, %s3, %s4
  %s6 = sld [smem:[#allocation0]]
  $region80: #{convblock_forward.6} parent=0
    _
  %s8 = ssub.s32 1, %s6
  %s9 = scalar_select 0, %s8, %s6
  $region1: #{convblock_forward.6} parent=0
    #allocation2 [shape = 'u8[458752]{0}', space=vmem, size = 0x70000, scoped, tag = 'input window, operand 1']
    loop: start=0, step=1, limit=4
    $region2: #{convblock_forward.6} parent=1 // loop_pre_header
      _
    $region3: #{convblock_forward.6} parent=1 // loop_header
      %s11 = sphi 0, %s15
      %p12 = scmp.ge.s32.totalorder %s11, 4
      %s19 = sphi 0, %s19
      %s21 = sphi 0, %s19
      %s22 = sphi 0, %s21
      %s36 = sphi 0, %s22
      %s42 = sphi 0, %s44
      %s45 = sphi 0, %s42
      %s46 = sphi 0, %s45
      %s62 = sphi 0, %s46
      %s68 = sphi 0, %s70
      %s71 = sphi 0, %s68
      %s72 = sphi 0, %s71
      %s88 = sphi 0, %s72
      %s94 = sphi 0, %s96
      %s97 = sphi 0, %s94
      %s98 = sphi 0, %s97
      %s114 = sphi 0, %s98
      %s120 = sphi 0, %s122
      %s123 = sphi 0, %s120
      %s124 = sphi 0, %s123
      %s140 = sphi 0, %s124
    $region4: #{convblock_forward.6} parent=1 // loop_header_branch
      %14 = sbr.rel (%p12) target = $region8
    $region5: #{convblock_forward.6} parent=1 // loop_body
      %s16 = ssub.s32 %s11, 1
      %s17 = ssub.s32 %s11, 2
      %s18 = sadd.s32 %s11, 1
      %s20 = sadd.s32 %s19, 1
      %p23 = scmp.eq.s32.totalorder %s11, 1
      %p24 = scmp.ne.s32.totalorder %s19, %s21
      %p25 = scmp.eq.s32.totalorder %s11, 0
      %p26 = por %p24, %p25
      %p27 = scmp.ne.s32.totalorder %s19, %s21
      %p28 = scmp.eq.s32.totalorder %s16, 1
      %p29 = por %p27, %p28
      %p30 = scmp.ne.s32.totalorder %s21, %s22
      %p31 = scmp.eq.s32.totalorder %s16, 0
      %p32 = por %p30, %p31
      %p33 = scmp.ne.s32.totalorder %s21, %s22
      %p34 = scmp.eq.s32.totalorder %s17, 1
      %p35 = por %p33, %p34
      %p37 = scmp.ne.s32.totalorder %s22, %s36
      %p38 = scmp.eq.s32.totalorder %s17, 0
      %p39 = por %p37, %p38
      %s40 = ssub.s32 %s11, %s18
      %p41 = scmp.eq.s32.totalorder %s40, 0
      %s43 = sadd.s32 %s42, 1
      %s44 = scalar_select %p41, %s42, %s43
      %p47 = pneg %p41
      %p48 = scmp.eq.s32.totalorder %s11, 1
      %p49 = por %p47, %p48
      %p50 = scmp.ne.s32.totalorder %s42, %s45
      %p51 = scmp.eq.s32.totalorder %s11, 0
      %p52 = por %p50, %p51
      %p53 = scmp.ne.s32.totalorder %s42, %s45
      %p54 = scmp.eq.s32.totalorder %s16, 1
      %p55 = por %p53, %p54
      %p56 = scmp.ne.s32.totalorder %s45, %s46
      %p57 = scmp.eq.s32.totalorder %s16, 0
      %p58 = por %p56, %p57
      %p59 = scmp.ne.s32.totalorder %s45, %s46
      %p60 = scmp.eq.s32.totalorder %s17, 1
      %p61 = por %p59, %p60
      %p63 = scmp.ne.s32.totalorder %s46, %s62
      %p64 = scmp.eq.s32.totalorder %s17, 0
      %p65 = por %p63, %p64
      %s66 = ssub.s32 %s11, %s18
      %p67 = scmp.eq.s32.totalorder %s66, 0
      %s69 = sadd.s32 %s68, 1
      %s70 = scalar_select %p67, %s68, %s69
      %p73 = pneg %p67
      %p74 = scmp.eq.s32.totalorder %s11, 1
      %p75 = por %p73, %p74
      %p76 = scmp.ne.s32.totalorder %s68, %s71
      %p77 = scmp.eq.s32.totalorder %s11, 0
      %p78 = por %p76, %p77
      %p79 = scmp.ne.s32.totalorder %s68, %s71
      %p80 = scmp.eq.s32.totalorder %s16, 1
      %p81 = por %p79, %p80
      %p82 = scmp.ne.s32.totalorder %s71, %s72
      %p83 = scmp.eq.s32.totalorder %s16, 0
      %p84 = por %p82, %p83
      %p85 = scmp.ne.s32.totalorder %s71, %s72
      %p86 = scmp.eq.s32.totalorder %s17, 1
      %p87 = por %p85, %p86
      %p89 = scmp.ne.s32.totalorder %s72, %s88
      %p90 = scmp.eq.s32.totalorder %s17, 0
      %p91 = por %p89, %p90
      %s92 = ssub.s32 %s11, %s18
      %p93 = scmp.eq.s32.totalorder %s92, 0
      %s95 = sadd.s32 %s94, 1
      %s96 = scalar_select %p93, %s94, %s95
      %p99 = pneg %p93
      %p100 = scmp.eq.s32.totalorder %s11, 1
      %p101 = por %p99, %p100
      %p102 = scmp.ne.s32.totalorder %s94, %s97
      %p103 = scmp.eq.s32.totalorder %s11, 0
      %p104 = por %p102, %p103
      %p105 = scmp.ne.s32.totalorder %s94, %s97
      %p106 = scmp.eq.s32.totalorder %s16, 1
      %p107 = por %p105, %p106
      %p108 = scmp.ne.s32.totalorder %s97, %s98
      %p109 = scmp.eq.s32.totalorder %s16, 0
      %p110 = por %p108, %p109
      %p111 = scmp.ne.s32.totalorder %s97, %s98
      %p112 = scmp.eq.s32.totalorder %s17, 1
      %p113 = por %p111, %p112
      %p115 = scmp.ne.s32.totalorder %s98, %s114
      %p116 = scmp.eq.s32.totalorder %s17, 0
      %p117 = por %p115, %p116
      %s118 = ssub.s32 %s11, %s18
      %p119 = scmp.eq.s32.totalorder %s118, 0
      %s121 = sadd.s32 %s120, 1
      %s122 = scalar_select %p119, %s120, %s121
      %p125 = pneg %p119
      %p126 = scmp.eq.s32.totalorder %s11, 1
      %p127 = por %p125, %p126
      %p128 = scmp.ne.s32.totalorder %s120, %s123
      %p129 = scmp.eq.s32.totalorder %s11, 0
      %p130 = por %p128, %p129
      %p131 = scmp.ne.s32.totalorder %s120, %s123
      %p132 = scmp.eq.s32.totalorder %s16, 1
      %p133 = por %p131, %p132
      %p134 = scmp.ne.s32.totalorder %s123, %s124
      %p135 = scmp.eq.s32.totalorder %s16, 0
      %p136 = por %p134, %p135
      %p137 = scmp.ne.s32.totalorder %s123, %s124
      %p138 = scmp.eq.s32.totalorder %s17, 1
      %p139 = por %p137, %p138
      %p141 = scmp.ne.s32.totalorder %s124, %s140
      %p142 = scmp.eq.s32.totalorder %s17, 0
      %p143 = por %p141, %p142
      %p144 = scmp.le.s32.totalorder 1, %s11
      %p145 = scmp.lt.s32.totalorder %s11, 3
      %p146 = pnand %p144, %p145
      %p147 = pneg %p146
      // Predicated region
      $region9: #{convblock_forward.6} parent=5 // pred_check
        _
      $region10: #{convblock_forward.6} parent=5 // pred_check_branch
        %149 = sbr.rel (%p146) target = $region12
      $region11: #{convblock_forward.6} parent=5 // pred_region
        %s150 = ssub.s32 %s11, 1
        // Predicated region
        $region13: #{convblock_forward.6} parent=11 // pred_check
          %p151 = pneg %p32
        $region14: #{convblock_forward.6} parent=11 // pred_check_branch
          %153 = sbr.rel (%p151) target = $region16
        $region15: #{convblock_forward.6} parent=11 // pred_region
          _
        $region16: #{convblock_forward.6} parent=11 // pred_fallthru
          _
      $region12: #{convblock_forward.6} parent=5 // pred_fallthru
        _
      %p154 = scmp.lt.s32.totalorder %s11, 2
      // Predicated region
      $region17: #{convblock_forward.6} parent=5 // pred_check
        %p155 = pneg %p154
      $region18: #{convblock_forward.6} parent=5 // pred_check_branch
        %157 = sbr.rel (%p155) target = $region20
      $region19: #{convblock_forward.6} parent=5 // pred_region
        // Predicated region
        $region21: #{convblock_forward.6} parent=19 // pred_check
          %p158 = pneg %p52
        $region22: #{convblock_forward.6} parent=19 // pred_check_branch
          %160 = sbr.rel (%p158) target = $region24
        $region23: #{convblock_forward.6} parent=19 // pred_region
          %s161 = sand.u32 %s42, 1
          %s162 = sand.u32 %s42, 1
          %s163 = smul.addr %s162, 448
          %s164 = scalar_lea.vmem [#allocation2], %s163
          %s165 = smul.u32 4, %s11
          %s166 = smul.addr %s165, 4
          %s167 = scalar_lea.vmem %s1, %s166
          // Predicated region
          $region25: #{convblock_forward.6} parent=23 // pred_check
            _
          $region26: #{convblock_forward.6} parent=23 // pred_check_branch
            %169 = sbr.rel (0) target = $region28
          $region27: #{convblock_forward.6} parent=23 // pred_region
            // Predicated region
            $region29: #{convblock_forward.6} parent=27 // pred_check
              _
            $region30: #{convblock_forward.6} parent=27 // pred_check_branch
              %171 = sbr.rel (0) target = $region32
            $region31: #{convblock_forward.6} parent=27 // pred_region
              loop: start=0, step=1, limit=1
              $region33: #{convblock_forward.6} parent=31 // loop_pre_header
                _
              $region34: #{convblock_forward.6} parent=31 // loop_header
                %s173 = sphi 0, %s177
                %p174 = scmp.ge.s32.totalorder %s173, 1
                %s178 = sphi %s167, %s167
                %s179 = sphi %s164, %s164
              $region35: #{convblock_forward.6} parent=31 // loop_header_branch
                %176 = sbr.rel (%p174) target = $region39
              $region36: #{convblock_forward.6} parent=31 // loop_body
                %v180 = vld [vmem:[%s178] sm:$0xff]
                %181 = vst [vmem:[%s179] sm:$0xff] %v180
                %v182 = vld [vmem:[%s178 + $0x8] sm:$0xff]
                %183 = vst [vmem:[%s179 + $0x8] sm:$0xff] %v182
                %v184 = vld [vmem:[%s178 + $0x20] sm:$0xff]
                %185 = vst [vmem:[%s179 + $0x10] sm:$0xff] %v184
                %v186 = vld [vmem:[%s178 + $0x28] sm:$0xff]
                %187 = vst [vmem:[%s179 + $0x18] sm:$0xff] %v186
                %v188 = vld [vmem:[%s178 + $0x40] sm:$0xff]
                %189 = vst [vmem:[%s179 + $0x20] sm:$0xff] %v188
                %v190 = vld [vmem:[%s178 + $0x48] sm:$0xff]
                %191 = vst [vmem:[%s179 + $0x28] sm:$0xff] %v190
                %v192 = vld [vmem:[%s178 + $0x60] sm:$0xff]
                %193 = vst [vmem:[%s179 + $0x30] sm:$0xff] %v192
                %v194 = vld [vmem:[%s178 + $0x68] sm:$0xff]
                %195 = vst [vmem:[%s179 + $0x38] sm:$0xff] %v194
                %v196 = vld [vmem:[%s178 + $0x80] sm:$0xff]
                %197 = vst [vmem:[%s179 + $0x40] sm:$0xff] %v196
                %v198 = vld [vmem:[%s178 + $0x88] sm:$0xff]
                %199 = vst [vmem:[%s179 + $0x48] sm:$0xff] %v198
                %v200 = vld [vmem:[%s178 + $0xa0] sm:$0xff]
                %201 = vst [vmem:[%s179 + $0x50] sm:$0xff] %v200
                %v202 = vld [vmem:[%s178 + $0xa8] sm:$0xff]
                %203 = vst [vmem:[%s179 + $0x58] sm:$0xff] %v202
                %v204 = vld [vmem:[%s178 + $0xc0] sm:$0xff]
                %205 = vst [vmem:[%s179 + $0x60] sm:$0xff] %v204
                %v206 = vld [vmem:[%s178 + $0xc8] sm:$0xff]
                %207 = vst [vmem:[%s179 + $0x68] sm:$0xff] %v206
                %v208 = vld [vmem:[%s178 + $0xe0] sm:$0xff]
                %209 = vst [vmem:[%s179 + $0x70] sm:$0xff] %v208
                %v210 = vld [vmem:[%s178 + $0xe8] sm:$0xff]
                %211 = vst [vmem:[%s179 + $0x78] sm:$0xff] %v210
                %v212 = vld [vmem:[%s178 + $0x100] sm:$0xff]
                %213 = vst [vmem:[%s179 + $0x80] sm:$0xff] %v212
                %v214 = vld [vmem:[%s178 + $0x108] sm:$0xff]
                %215 = vst [vmem:[%s179 + $0x88] sm:$0xff] %v214
                %v216 = vld [vmem:[%s178 + $0x120] sm:$0xff]
                %217 = vst [vmem:[%s179 + $0x90] sm:$0xff] %v216
                %v218 = vld [vmem:[%s178 + $0x128] sm:$0xff]
                %219 = vst [vmem:[%s179 + $0x98] sm:$0xff] %v218
                %v220 = vld [vmem:[%s178 + $0x140] sm:$0xff]
                %221 = vst [vmem:[%s179 + $0xa0] sm:$0xff] %v220
                %v222 = vld [vmem:[%s178 + $0x148] sm:$0xff]
                %223 = vst [vmem:[%s179 + $0xa8] sm:$0xff] %v222
                %v224 = vld [vmem:[%s178 + $0x160] sm:$0xff]
                %225 = vst [vmem:[%s179 + $0xb0] sm:$0xff] %v224
                %v226 = vld [vmem:[%s178 + $0x168] sm:$0xff]
                %227 = vst [vmem:[%s179 + $0xb8] sm:$0xff] %v226
                %v228 = vld [vmem:[%s178 + $0x180] sm:$0xff]
                %229 = vst [vmem:[%s179 + $0xc0] sm:$0xff] %v228
                %v230 = vld [vmem:[%s178 + $0x188] sm:$0xff]
                %231 = vst [vmem:[%s179 + $0xc8] sm:$0xff] %v230
                %v232 = vld [vmem:[%s178 + $0x1a0] sm:$0xff]
                %233 = vst [vmem:[%s179 + $0xd0] sm:$0xff] %v232
                %v234 = vld [vmem:[%s178 + $0x1a8] sm:$0xff]
                %235 = vst [vmem:[%s179 + $0xd8] sm:$0xff] %v234
                %v236 = vld [vmem:[%s178 + $0x1c0] sm:$0xff]
                %237 = vst [vmem:[%s179 + $0xe0] sm:$0xff] %v236
                %v238 = vld [vmem:[%s178 + $0x1c8] sm:$0xff]
                %239 = vst [vmem:[%s179 + $0xe8] sm:$0xff] %v238
                %v240 = vld [vmem:[%s178 + $0x1e0] sm:$0xff]
                %241 = vst [vmem:[%s179 + $0xf0] sm:$0xff] %v240
                %v242 = vld [vmem:[%s178 + $0x1e8] sm:$0xff]
                %243 = vst [vmem:[%s179 + $0xf8] sm:$0xff] %v242
                %v244 = vld [vmem:[%s178 + $0x200] sm:$0xff]
                %245 = vst [vmem:[%s179 + $0x100] sm:$0xff] %v244
                %v246 = vld [vmem:[%s178 + $0x208] sm:$0xff]
                %247 = vst [vmem:[%s179 + $0x108] sm:$0xff] %v246
                %v248 = vld [vmem:[%s178 + $0x220] sm:$0xff]
                %249 = vst [vmem:[%s179 + $0x110] sm:$0xff] %v248
                %v250 = vld [vmem:[%s178 + $0x228] sm:$0xff]
                %251 = vst [vmem:[%s179 + $0x118] sm:$0xff] %v250
                %v252 = vld [vmem:[%s178 + $0x240] sm:$0xff]
                %253 = vst [vmem:[%s179 + $0x120] sm:$0xff] %v252
                %v254 = vld [vmem:[%s178 + $0x248] sm:$0xff]
                %255 = vst [vmem:[%s179 + $0x128] sm:$0xff] %v254
                %v256 = vld [vmem:[%s178 + $0x260] sm:$0xff]
                %257 = vst [vmem:[%s179 + $0x130] sm:$0xff] %v256
                %v258 = vld [vmem:[%s178 + $0x268] sm:$0xff]
                %259 = vst [vmem:[%s179 + $0x138] sm:$0xff] %v258
                %v260 = vld [vmem:[%s178 + $0x280] sm:$0xff]
                %261 = vst [vmem:[%s179 + $0x140] sm:$0xff] %v260
                %v262 = vld [vmem:[%s178 + $0x288] sm:$0xff]
                %263 = vst [vmem:[%s179 + $0x148] sm:$0xff] %v262
                %v264 = vld [vmem:[%s178 + $0x2a0] sm:$0xff]
                %265 = vst [vmem:[%s179 + $0x150] sm:$0xff] %v264
                %v266 = vld [vmem:[%s178 + $0x2a8] sm:$0xff]
                %267 = vst [vmem:[%s179 + $0x158] sm:$0xff] %v266
                %v268 = vld [vmem:[%s178 + $0x2c0] sm:$0xff]
                %269 = vst [vmem:[%s179 + $0x160] sm:$0xff] %v268
                %v270 = vld [vmem:[%s178 + $0x2c8] sm:$0xff]
                %271 = vst [vmem:[%s179 + $0x168] sm:$0xff] %v270
                %v272 = vld [vmem:[%s178 + $0x2e0] sm:$0xff]
                %273 = vst [vmem:[%s179 + $0x170] sm:$0xff] %v272
                %v274 = vld [vmem:[%s178 + $0x2e8] sm:$0xff]
                %275 = vst [vmem:[%s179 + $0x178] sm:$0xff] %v274
                %v276 = vld [vmem:[%s178 + $0x300] sm:$0xff]
                %277 = vst [vmem:[%s179 + $0x180] sm:$0xff] %v276
                %v278 = vld [vmem:[%s178 + $0x308] sm:$0xff]
                %279 = vst [vmem:[%s179 + $0x188] sm:$0xff] %v278
                %v280 = vld [vmem:[%s178 + $0x320] sm:$0xff]
                %281 = vst [vmem:[%s179 + $0x190] sm:$0xff] %v280
                %v282 = vld [vmem:[%s178 + $0x328] sm:$0xff]
                %283 = vst [vmem:[%s179 + $0x198] sm:$0xff] %v282
                %v284 = vld [vmem:[%s178 + $0x340] sm:$0xff]
                %285 = vst [vmem:[%s179 + $0x1a0] sm:$0xff] %v284
                %v286 = vld [vmem:[%s178 + $0x348] sm:$0xff]
                %287 = vst [vmem:[%s179 + $0x1a8] sm:$0xff] %v286
                %v288 = vld [vmem:[%s178 + $0x360] sm:$0xff]
                %289 = vst [vmem:[%s179 + $0x1b0] sm:$0xff] %v288
                %v290 = vld [vmem:[%s178 + $0x368] sm:$0xff]
                %291 = vst [vmem:[%s179 + $0x1b8] sm:$0xff] %v290
              $region37: #{convblock_forward.6} parent=31 // loop_footer
                %s177 = sadd.s32 1, %s173
              $region38: #{convblock_forward.6} parent=31 // loop_footer_branch
                %172 = sbr.rel target = $region34
              $region39: #{convblock_forward.6} parent=31 // loop_exit
                _
            $region32: #{convblock_forward.6} parent=27 // pred_fallthru
              _
            // Predicated region
            $region40: #{convblock_forward.6} parent=27 // pred_check
              _
            $region41: #{convblock_forward.6} parent=27 // pred_check_branch
              %293 = sbr.rel target = $region43
            $region42: #{convblock_forward.6} parent=27 // pred_region
              _
            $region43: #{convblock_forward.6} parent=27 // pred_fallthru
              _
          $region28: #{convblock_forward.6} parent=23 // pred_fallthru
            _
          %294 = vnop
        $region24: #{convblock_forward.6} parent=19 // pred_fallthru
          _
      $region20: #{convblock_forward.6} parent=5 // pred_fallthru
        _
      %p295 = scmp.le.s32.totalorder 1, %s11
      %p296 = scmp.lt.s32.totalorder %s11, 3
      %p297 = pnand %p295, %p296
      %p298 = pneg %p297
      // Predicated region
      $region44: #{convblock_forward.6} parent=5 // pred_check
        _
      $region45: #{convblock_forward.6} parent=5 // pred_check_branch
        %300 = sbr.rel (%p297) target = $region47
      $region46: #{convblock_forward.6} parent=5 // pred_region
        %s301 = ssub.s32 %s11, 1
        %s302 = sand.u32 %s45, 1
        %s303 = sand.u32 %s45, 1
        %s304 = smul.addr %s303, 448
        %s305 = scalar_lea.vmem [#allocation2], %s304
        // Predicated region
        $region48: #{convblock_forward.6} parent=46 // pred_check
          %p306 = pneg %p58
        $region49: #{convblock_forward.6} parent=46 // pred_check_branch
          %308 = sbr.rel (%p306) target = $region51
        $region50: #{convblock_forward.6} parent=46 // pred_region
          _
        $region51: #{convblock_forward.6} parent=46 // pred_fallthru
          _
        %p309 = pneg %p32
        %p310 = pneg %p29
        %s311 = sand.u32 %s45, 1
        %s312 = sand.u32 %s45, 1
        %s313 = smul.addr %s312, 448
        %s314 = scalar_lea.vmem [#allocation2], %s313
        %p315 = pneg %p58
        %p316 = pneg %p55
        %p317 = pneg %p84
        %p318 = pneg %p81
        %s319 = smul.u32 4, %s16
        %p320 = scmp.lt.s32.totalorder %s319, 7
        %s321 = scalar_select %p320, %s319, 7
        %s322 = smul.addr %s321, 8
        %s323 = scalar_lea.vmem %s2, %s322
        %p324 = pneg %p110
        %p325 = pneg %p107
        %p326 = scmp.lt.s32.totalorder %s16, 1
        %s327 = scalar_select %p326, %s16, 1
        %s328 = smul.addr %s327, 8
        %s329 = scalar_lea.vmem %s3, %s328
        %p330 = pneg %p136
        %p331 = pneg %p133
        %p332 = scmp.lt.s32.totalorder %s16, 1
        %s333 = scalar_select %p332, %s16, 1
        %s334 = smul.addr %s333, 8
        %s335 = scalar_lea.vmem %s4, %s334
        %s336 = smul.u32 4, %s16
        %s337 = smul.u32 4, %s16
        %p338 = scmp.lt.s32.totalorder %s337, 7
        %s339 = scalar_select %p338, %s337, 7
        %s340 = smul.addr %s339, 8
        %s341 = scalar_lea.vmem %s2, %s340
        %s342 = smul.u32 4, %s16
        %p343 = scmp.lt.s32.totalorder %s16, 1
        %s344 = scalar_select %p343, %s16, 1
        %s345 = smul.addr %s344, 8
        %s346 = scalar_lea.vmem %s3, %s345
        %p347 = scmp.lt.s32.totalorder %s16, 1
        %s348 = scalar_select %p347, %s16, 1
        %s349 = smul.addr %s348, 8
        %s350 = scalar_lea.vmem %s4, %s349
        %v352 = vld [vmem:[%s0] sm:$0xff]
        %v353 = vld [vmem:[%s305] sm:$0xff]
        %v354 = vld [vmem:[%s305 + $0x8] sm:$0xff]
        %v355 = vld [vmem:[%s305 + $0x10] sm:$0xff]
        %v356 = vld [vmem:[%s305 + $0x18] sm:$0xff]
        %v357 = vld [vmem:[%s305 + $0x20] sm:$0xff]
        %v358 = vld [vmem:[%s305 + $0x28] sm:$0xff]
        %v359 = vld [vmem:[%s305 + $0x30] sm:$0xff]
        %v360 = vld [vmem:[%s305 + $0x38] sm:$0xff]
        %v361 = vld [vmem:[%s305 + $0x40] sm:$0xff]
        %v362 = vld [vmem:[%s305 + $0x48] sm:$0xff]
        %v363 = vld [vmem:[%s305 + $0x50] sm:$0xff]
        %v364 = vld [vmem:[%s305 + $0x58] sm:$0xff]
        %v365 = vld [vmem:[%s305 + $0x60] sm:$0xff]
        %v366 = vld [vmem:[%s305 + $0x68] sm:$0xff]
        %v367 = vld [vmem:[%s305 + $0x70] sm:$0xff]
        %v368 = vld [vmem:[%s305 + $0x78] sm:$0xff]
        %v369 = vld [vmem:[%s305 + $0x80] sm:$0xff]
        %v370 = vld [vmem:[%s305 + $0x88] sm:$0xff]
        %v371 = vld [vmem:[%s305 + $0x90] sm:$0xff]
        %v372 = vld [vmem:[%s305 + $0x98] sm:$0xff]
        %v373 = vld [vmem:[%s305 + $0xa0] sm:$0xff]
        %v374 = vld [vmem:[%s305 + $0xa8] sm:$0xff]
        %v375 = vld [vmem:[%s305 + $0xb0] sm:$0xff]
        %v376 = vld [vmem:[%s305 + $0xb8] sm:$0xff]
        %v377 = vld [vmem:[%s305 + $0xc0] sm:$0xff]
        %v378 = vld [vmem:[%s305 + $0xc8] sm:$0xff]
        %v379 = vld [vmem:[%s305 + $0xd0] sm:$0xff]
        %v380 = vld [vmem:[%s305 + $0xd8] sm:$0xff]
        %v381 = vld [vmem:[%s305 + $0xe0] sm:$0xff]
        %v382 = vld [vmem:[%s305 + $0xe8] sm:$0xff]
        %v383 = vld [vmem:[%s305 + $0xf0] sm:$0xff]
        %v384 = vld [vmem:[%s305 + $0xf8] sm:$0xff]
        %v385 = vld [vmem:[%s305 + $0x100] sm:$0xff]
        %v386 = vld [vmem:[%s305 + $0x108] sm:$0xff]
        %v387 = vld [vmem:[%s305 + $0x110] sm:$0xff]
        %v388 = vld [vmem:[%s305 + $0x118] sm:$0xff]
        %v389 = vld [vmem:[%s305 + $0x120] sm:$0xff]
        %v390 = vld [vmem:[%s305 + $0x128] sm:$0xff]
        %v391 = vld [vmem:[%s305 + $0x130] sm:$0xff]
        %v392 = vld [vmem:[%s305 + $0x138] sm:$0xff]
        %v393 = vld [vmem:[%s305 + $0x140] sm:$0xff]
        %v394 = vld [vmem:[%s305 + $0x148] sm:$0xff]
        %v395 = vld [vmem:[%s305 + $0x150] sm:$0xff]
        %v396 = vld [vmem:[%s305 + $0x158] sm:$0xff]
        %v397 = vld [vmem:[%s305 + $0x160] sm:$0xff]
        %v398 = vld [vmem:[%s305 + $0x168] sm:$0xff]
        %v399 = vld [vmem:[%s305 + $0x170] sm:$0xff]
        %v400 = vld [vmem:[%s305 + $0x178] sm:$0xff]
        %v401 = vld [vmem:[%s305 + $0x180] sm:$0xff]
        %v402 = vld [vmem:[%s305 + $0x188] sm:$0xff]
        %v403 = vld [vmem:[%s305 + $0x190] sm:$0xff]
        %v404 = vld [vmem:[%s305 + $0x198] sm:$0xff]
        %v405 = vld [vmem:[%s305 + $0x1a0] sm:$0xff]
        %v406 = vld [vmem:[%s305 + $0x1a8] sm:$0xff]
        %v407 = vld [vmem:[%s305 + $0x1b0] sm:$0xff]
        %v408 = vld [vmem:[%s305 + $0x1b8] sm:$0xff]
        %v410 = vunpack.c.l.b16 %v352
        %v411 = vunpack.c.h.b16 %v352
        %v412 = vpack.c.b16 %v410, %v410
        %v413 = vpack.c.b16 %v411, %v411
        %v471 = vunpack.c.l.b16 %v353
        %v472 = vunpack.c.h.b16 %v353
        %v473 = vunpack.c.l.b16 %v354
        %v474 = vunpack.c.h.b16 %v354
        %v475 = vunpack.c.l.b16 %v355
        %v476 = vunpack.c.h.b16 %v355
        %v477 = vunpack.c.l.b16 %v356
        %v478 = vunpack.c.h.b16 %v356
        %v479 = vunpack.c.l.b16 %v357
        %v480 = vunpack.c.h.b16 %v357
        %v481 = vunpack.c.l.b16 %v358
        %v482 = vunpack.c.h.b16 %v358
        %v483 = vunpack.c.l.b16 %v359
        %v484 = vunpack.c.h.b16 %v359
        %v485 = vunpack.c.l.b16 %v360
        %v486 = vunpack.c.h.b16 %v360
        %v487 = vunpack.c.l.b16 %v361
        %v488 = vunpack.c.h.b16 %v361
        %v489 = vunpack.c.l.b16 %v362
        %v490 = vunpack.c.h.b16 %v362
        %v491 = vunpack.c.l.b16 %v363
        %v492 = vunpack.c.h.b16 %v363
        %v493 = vunpack.c.l.b16 %v364
        %v494 = vunpack.c.h.b16 %v364
        %v495 = vunpack.c.l.b16 %v365
        %v496 = vunpack.c.h.b16 %v365
        %v497 = vunpack.c.l.b16 %v366
        %v498 = vunpack.c.h.b16 %v366
        %v499 = vunpack.c.l.b16 %v367
        %v500 = vunpack.c.h.b16 %v367
        %v501 = vunpack.c.l.b16 %v368
        %v502 = vunpack.c.h.b16 %v368
        %v503 = vunpack.c.l.b16 %v369
        %v504 = vunpack.c.h.b16 %v369
        %v505 = vunpack.c.l.b16 %v370
        %v506 = vunpack.c.h.b16 %v370
        %v507 = vunpack.c.l.b16 %v371
        %v508 = vunpack.c.h.b16 %v371
        %v509 = vunpack.c.l.b16 %v372
        %v510 = vunpack.c.h.b16 %v372
        %v511 = vunpack.c.l.b16 %v373
        %v512 = vunpack.c.h.b16 %v373
        %v513 = vunpack.c.l.b16 %v374
        %v514 = vunpack.c.h.b16 %v374
        %v515 = vunpack.c.l.b16 %v375
        %v516 = vunpack.c.h.b16 %v375
        %v517 = vunpack.c.l.b16 %v376
        %v518 = vunpack.c.h.b16 %v376
        %v519 = vunpack.c.l.b16 %v377
        %v520 = vunpack.c.h.b16 %v377
        %v521 = vunpack.c.l.b16 %v378
        %v522 = vunpack.c.h.b16 %v378
        %v523 = vunpack.c.l.b16 %v379
        %v524 = vunpack.c.h.b16 %v379
        %v525 = vunpack.c.l.b16 %v380
        %v526 = vunpack.c.h.b16 %v380
        %v527 = vunpack.c.l.b16 %v381
        %v528 = vunpack.c.h.b16 %v381
        %v529 = vunpack.c.l.b16 %v382
        %v530 = vunpack.c.h.b16 %v382
        %v531 = vunpack.c.l.b16 %v383
        %v532 = vunpack.c.h.b16 %v383
        %v533 = vunpack.c.l.b16 %v384
        %v534 = vunpack.c.h.b16 %v384
        %v535 = vunpack.c.l.b16 %v385
        %v536 = vunpack.c.h.b16 %v385
        %v537 = vunpack.c.l.b16 %v386
        %v538 = vunpack.c.h.b16 %v386
        %v539 = vunpack.c.l.b16 %v387
        %v540 = vunpack.c.h.b16 %v387
        %v541 = vunpack.c.l.b16 %v388
        %v542 = vunpack.c.h.b16 %v388
        %v543 = vunpack.c.l.b16 %v389
        %v544 = vunpack.c.h.b16 %v389
        %v545 = vunpack.c.l.b16 %v390
        %v546 = vunpack.c.h.b16 %v390
        %v547 = vunpack.c.l.b16 %v391
        %v548 = vunpack.c.h.b16 %v391
        %v549 = vunpack.c.l.b16 %v392
        %v550 = vunpack.c.h.b16 %v392
        %v551 = vunpack.c.l.b16 %v393
        %v552 = vunpack.c.h.b16 %v393
        %v553 = vunpack.c.l.b16 %v394
        %v554 = vunpack.c.h.b16 %v394
        %v555 = vunpack.c.l.b16 %v395
        %v556 = vunpack.c.h.b16 %v395
        %v557 = vunpack.c.l.b16 %v396
        %v558 = vunpack.c.h.b16 %v396
        %v559 = vunpack.c.l.b16 %v397
        %v560 = vunpack.c.h.b16 %v397
        %v561 = vunpack.c.l.b16 %v398
        %v562 = vunpack.c.h.b16 %v398
        %v563 = vunpack.c.l.b16 %v399
        %v564 = vunpack.c.h.b16 %v399
        %v565 = vunpack.c.l.b16 %v400
        %v566 = vunpack.c.h.b16 %v400
        %v567 = vunpack.c.l.b16 %v401
        %v568 = vunpack.c.h.b16 %v401
        %v569 = vunpack.c.l.b16 %v402
        %v570 = vunpack.c.h.b16 %v402
        %v571 = vunpack.c.l.b16 %v403
        %v572 = vunpack.c.h.b16 %v403
        %v573 = vunpack.c.l.b16 %v404
        %v574 = vunpack.c.h.b16 %v404
        %v575 = vunpack.c.l.b16 %v405
        %v576 = vunpack.c.h.b16 %v405
        %v577 = vunpack.c.l.b16 %v406
        %v578 = vunpack.c.h.b16 %v406
        %v579 = vunpack.c.l.b16 %v407
        %v580 = vunpack.c.h.b16 %v407
        %v581 = vunpack.c.l.b16 %v408
        %v582 = vunpack.c.h.b16 %v408
        %v583 = vpack.c.b16 %v475, %v471
        %v584 = vpack.c.b16 %v476, %v472
        %v585 = vpack.c.b16 %v477, %v473
        %v586 = vpack.c.b16 %v478, %v474
        %v587 = vpack.c.b16 %v483, %v479
        %v588 = vpack.c.b16 %v484, %v480
        %v589 = vpack.c.b16 %v485, %v481
        %v590 = vpack.c.b16 %v486, %v482
        %v591 = vpack.c.b16 %v491, %v487
        %v592 = vpack.c.b16 %v492, %v488
        %v593 = vpack.c.b16 %v493, %v489
        %v594 = vpack.c.b16 %v494, %v490
        %v595 = vpack.c.b16 %v499, %v495
        %v596 = vpack.c.b16 %v500, %v496
        %v597 = vpack.c.b16 %v501, %v497
        %v598 = vpack.c.b16 %v502, %v498
        %v599 = vpack.c.b16 %v507, %v503
        %v600 = vpack.c.b16 %v508, %v504
        %v601 = vpack.c.b16 %v509, %v505
        %v602 = vpack.c.b16 %v510, %v506
        %v603 = vpack.c.b16 %v515, %v511
        %v604 = vpack.c.b16 %v516, %v512
        %v605 = vpack.c.b16 %v517, %v513
        %v606 = vpack.c.b16 %v518, %v514
        %v607 = vpack.c.b16 %v523, %v519
        %v608 = vpack.c.b16 %v524, %v520
        %v609 = vpack.c.b16 %v525, %v521
        %v610 = vpack.c.b16 %v526, %v522
        %v611 = vpack.c.b16 %v531, %v527
        %v612 = vpack.c.b16 %v532, %v528
        %v613 = vpack.c.b16 %v533, %v529
        %v614 = vpack.c.b16 %v534, %v530
        %v615 = vpack.c.b16 %v539, %v535
        %v616 = vpack.c.b16 %v540, %v536
        %v617 = vpack.c.b16 %v541, %v537
        %v618 = vpack.c.b16 %v542, %v538
        %v619 = vpack.c.b16 %v547, %v543
        %v620 = vpack.c.b16 %v548, %v544
        %v621 = vpack.c.b16 %v549, %v545
        %v622 = vpack.c.b16 %v550, %v546
        %v623 = vpack.c.b16 %v555, %v551
        %v624 = vpack.c.b16 %v556, %v552
        %v625 = vpack.c.b16 %v557, %v553
        %v626 = vpack.c.b16 %v558, %v554
        %v627 = vpack.c.b16 %v563, %v559
        %v628 = vpack.c.b16 %v564, %v560
        %v629 = vpack.c.b16 %v565, %v561
        %v630 = vpack.c.b16 %v566, %v562
        %v631 = vpack.c.b16 %v571, %v567
        %v632 = vpack.c.b16 %v572, %v568
        %v633 = vpack.c.b16 %v573, %v569
        %v634 = vpack.c.b16 %v574, %v570
        %v635 = vpack.c.b16 %v579, %v575
        %v636 = vpack.c.b16 %v580, %v576
        %v637 = vpack.c.b16 %v581, %v577
        %v638 = vpack.c.b16 %v582, %v578
        %vm695 = vcmask 785408
        %v697 = vsel %vm695, %v413, 0
        %699 = vmatprep.subr.bf16.mxu0 %v584
        %700 = vmatpush1.bf16.msra.mxu0 %v583
        %701 = vmatprep.subr.bf16.mxu0 %v588
        %702 = vmatpush1.bf16.msra.mxu0 %v587
        %703 = vmatprep.subr.bf16.mxu0 %v592
        %704 = vmatpush1.bf16.msra.mxu0 %v591
        %705 = vmatprep.subr.bf16.mxu0 %v596
        %706 = vmatpush1.bf16.msra.mxu0 %v595
        %707 = vmatprep.subr.bf16.mxu0 %v600
        %708 = vmatpush1.bf16.msra.mxu0 %v599
        %709 = vmatprep.subr.bf16.mxu0 %v604
        %710 = vmatpush1.bf16.msra.mxu0 %v603
        %711 = vmatprep.subr.bf16.mxu0 %v608
        %712 = vmatpush1.bf16.msra.mxu0 %v607
        %713 = vmatprep.subr.bf16.mxu0 %v612
        %714 = vmatpush1.bf16.msra.mxu0 %v611
        %715 = vmatprep.subr.bf16.mxu0 %v616
        %716 = vmatpush1.bf16.msra.mxu0 %v615
        %717 = vmatprep.subr.bf16.mxu0 %v620
        %718 = vmatpush1.bf16.msra.mxu0 %v619
        %719 = vmatprep.subr.bf16.mxu0 %v624
        %720 = vmatpush1.bf16.msra.mxu0 %v623
        %721 = vmatprep.subr.bf16.mxu0 %v628
        %722 = vmatpush1.bf16.msra.mxu0 %v627
        %723 = vmatprep.subr.bf16.mxu0 %v632
        %724 = vmatpush1.bf16.msra.mxu0 %v631
        %725 = vmatprep.subr.bf16.mxu0 %v636
        %726 = vmatpush1.bf16.msra.mxu0 %v635
        %727 = vmatprep.subr.bf16.mxu0 0
        %728 = vmatpush1.bf16.msra.mxu0 0
        %729 = vmatprep.subr.bf16.mxu0 0
        %730 = vmatpush1.bf16.msra.mxu0 0
        %731 = vmatprep.mubr.bf16.mxu0 %v697
        %732 = vmatmul.mubr.bf16.gmra.mrb[0].mxu0 %v412
        %v733 = vpop.f32.mrb[0].mxu0
        %v734 = vadd.f32 0.0, %v733
        %v735 = vpop.f32.mrb[0].mxu0
        %v736 = vadd.f32 0.0, %v735
        %v737 = vpop.f32.mrb[0].mxu0
        %v738 = vpop.f32.mrb[0].mxu0
        %739 = vdwg.mxu0
        %740 = vmatprep.subr.bf16.mxu0 %v586
        %741 = vmatpush1.bf16.msra.mxu0 %v585
        %742 = vmatprep.subr.bf16.mxu0 %v590
        %743 = vmatpush1.bf16.msra.mxu0 %v589
        %744 = vmatprep.subr.bf16.mxu0 %v594
        %745 = vmatpush1.bf16.msra.mxu0 %v593
        %746 = vmatprep.subr.bf16.mxu0 %v598
        %747 = vmatpush1.bf16.msra.mxu0 %v597
        %748 = vmatprep.subr.bf16.mxu0 %v602
        %749 = vmatpush1.bf16.msra.mxu0 %v601
        %750 = vmatprep.subr.bf16.mxu0 %v606
        %751 = vmatpush1.bf16.msra.mxu0 %v605
        %752 = vmatprep.subr.bf16.mxu0 %v610
        %753 = vmatpush1.bf16.msra.mxu0 %v609
        %754 = vmatprep.subr.bf16.mxu0 %v614
        %755 = vmatpush1.bf16.msra.mxu0 %v613
        %756 = vmatprep.subr.bf16.mxu0 %v618
        %757 = vmatpush1.bf16.msra.mxu0 %v617
        %758 = vmatprep.subr.bf16.mxu0 %v622
        %759 = vmatpush1.bf16.msra.mxu0 %v621
        %760 = vmatprep.subr.bf16.mxu0 %v626
        %761 = vmatpush1.bf16.msra.mxu0 %v625
        %762 = vmatprep.subr.bf16.mxu0 %v630
        %763 = vmatpush1.bf16.msra.mxu0 %v629
        %764 = vmatprep.subr.bf16.mxu0 %v634
        %765 = vmatpush1.bf16.msra.mxu0 %v633
        %766 = vmatprep.subr.bf16.mxu0 %v638
        %767 = vmatpush1.bf16.msra.mxu0 %v637
        %768 = vmatprep.subr.bf16.mxu0 0
        %769 = vmatpush1.bf16.msra.mxu0 0
        %770 = vmatprep.subr.bf16.mxu0 0
        %771 = vmatpush1.bf16.msra.mxu0 0
        %772 = vmatprep.mubr.bf16.mxu0 %v697
        %773 = vmatmul.mubr.bf16.gmra.mrb[0].mxu0 %v412
        %v774 = vpop.f32.mrb[0].mxu0
        %v775 = vadd.f32 0.0, %v774
        %v776 = vpop.f32.mrb[0].mxu0
        %v777 = vadd.f32 0.0, %v776
        %v778 = vpop.f32.mrb[0].mxu0
        %v779 = vpop.f32.mrb[0].mxu0
        %780 = vdwg.mxu0
        %781 = vst [vmem:[%s341] sm:$0xff] %v734
        %782 = vst [vmem:[%s341 + $0x8] sm:$0xff] %v736
        %783 = vst [vmem:[%s341 + $0x10] sm:$0xff] %v775
        %784 = vst [vmem:[%s341 + $0x18] sm:$0xff] %v777
        %v785 = vadd.f32 %v734, %v736
        %v786 = vadd.f32 %v785, %v775
        %v787 = vadd.f32 %v786, %v777
        %788 = vadd.xlane.f32.xlu0 %v787
        %v789 = vpop.xlane.xlu0 %788
        %vm790 = vcmask 7168
        %791 = vst.msk [vmem:[%s346] sm:$0xff] %vm790, %v789
        %v792 = vmul.f32 %v734, %v734
        %v793 = vmul.f32 %v736, %v736
        %v794 = vmul.f32 %v775, %v775
        %v795 = vmul.f32 %v777, %v777
        %v796 = vadd.f32 %v792, %v793
        %v797 = vadd.f32 %v796, %v794
        %v798 = vadd.f32 %v797, %v795
        %799 = vadd.xlane.f32.xlu0 %v798
        %v800 = vpop.xlane.xlu0 %799
        %801 = vst.msk [vmem:[%s350] sm:$0xff] %vm790, %v800
        %s802 = smul.u32 4, %s16
        %p803 = scmp.lt.s32.totalorder %s802, 7
        %s804 = scalar_select %p803, %s802, 7
        %s805 = smul.addr %s804, 8
        %s806 = scalar_lea.vmem %s2, %s805
        %p807 = scmp.lt.s32.totalorder %s16, 1
        %s808 = scalar_select %p807, %s16, 1
        %s809 = smul.addr %s808, 8
        %s810 = scalar_lea.vmem %s3, %s809
        %p811 = scmp.lt.s32.totalorder %s16, 1
        %s812 = scalar_select %p811, %s16, 1
        %s813 = smul.addr %s812, 8
        %s814 = scalar_lea.vmem %s4, %s813
        // Predicated region
        $region52: #{convblock_forward.6} parent=46 // pred_check
          %p815 = pneg %p81
        $region53: #{convblock_forward.6} parent=46 // pred_check_branch
          %817 = sbr.rel (%p815) target = $region55
        $region54: #{convblock_forward.6} parent=46 // pred_region
          %s818 = smul.u32 4, %s16
        $region55: #{convblock_forward.6} parent=46 // pred_fallthru
          _
        // Predicated region
        $region56: #{convblock_forward.6} parent=46 // pred_check
          %p819 = pneg %p107
        $region57: #{convblock_forward.6} parent=46 // pred_check_branch
          %821 = sbr.rel (%p819) target = $region59
        $region58: #{convblock_forward.6} parent=46 // pred_region
          _
        $region59: #{convblock_forward.6} parent=46 // pred_fallthru
          _
        // Predicated region
        $region60: #{convblock_forward.6} parent=46 // pred_check
          %p822 = pneg %p133
        $region61: #{convblock_forward.6} parent=46 // pred_check_branch
          %824 = sbr.rel (%p822) target = $region63
        $region62: #{convblock_forward.6} parent=46 // pred_region
          _
        $region63: #{convblock_forward.6} parent=46 // pred_fallthru
          _
      $region47: #{convblock_forward.6} parent=5 // pred_fallthru
        _
      %p825 = scmp.le.s32.totalorder 2, %s11
      // Predicated region
      $region64: #{convblock_forward.6} parent=5 // pred_check
        %p826 = pneg %p825
      $region65: #{convblock_forward.6} parent=5 // pred_check_branch
        %828 = sbr.rel (%p826) target = $region67
      $region66: #{convblock_forward.6} parent=5 // pred_region
        %s829 = ssub.s32 %s11, 2
        // Predicated region
        $region68: #{convblock_forward.6} parent=66 // pred_check
          %p830 = pneg %p87
        $region69: #{convblock_forward.6} parent=66 // pred_check_branch
          %832 = sbr.rel (%p830) target = $region71
        $region70: #{convblock_forward.6} parent=66 // pred_region
          %s833 = smul.u32 4, %s17
          %p834 = scmp.lt.s32.totalorder %s833, 7
          %s835 = scalar_select %p834, %s833, 7
          %s836 = smul.addr %s835, 8
          %s837 = scalar_lea.vmem %s2, %s836
        $region71: #{convblock_forward.6} parent=66 // pred_fallthru
          _
        // Predicated region
        $region72: #{convblock_forward.6} parent=66 // pred_check
          %p838 = pneg %p113
        $region73: #{convblock_forward.6} parent=66 // pred_check_branch
          %840 = sbr.rel (%p838) target = $region75
        $region74: #{convblock_forward.6} parent=66 // pred_region
          %p841 = scmp.lt.s32.totalorder %s17, 1
          %s842 = scalar_select %p841, %s17, 1
          %s843 = smul.addr %s842, 8
          %s844 = scalar_lea.vmem %s3, %s843
        $region75: #{convblock_forward.6} parent=66 // pred_fallthru
          _
        // Predicated region
        $region76: #{convblock_forward.6} parent=66 // pred_check
          %p845 = pneg %p139
        $region77: #{convblock_forward.6} parent=66 // pred_check_branch
          %847 = sbr.rel (%p845) target = $region79
        $region78: #{convblock_forward.6} parent=66 // pred_region
          %p848 = scmp.lt.s32.totalorder %s17, 1
          %s849 = scalar_select %p848, %s17, 1
          %s850 = smul.addr %s849, 8
          %s851 = scalar_lea.vmem %s4, %s850
        $region79: #{convblock_forward.6} parent=66 // pred_fallthru
          _
      $region67: #{convblock_forward.6} parent=5 // pred_fallthru
        _
    $region6: #{convblock_forward.6} parent=1 // loop_footer
      %s15 = sadd.s32 1, %s11
    $region7: #{convblock_forward.6} parent=1 // loop_footer_branch
      %10 = sbr.rel target = $region3
    $region8: #{convblock_forward.6} parent=1 // loop_exit
      _

</llo_original>
